<compile_context>
chip_gen: v5e
topology: v5e:2x2
jax: 0.10.0
libtpu: 0.0.40
codegen_flags: <defaults>
</compile_context>

<pallas_src>
import functools

import jax
import jax.numpy as jnp
import numpy as np
from jax.experimental import pallas as pl
from jax.experimental.pallas import tpu as pltpu


def _round_up(x, m):
    return (x + m - 1) // m * m


def _tpu_vmem_capacity_bytes():
    """Physical VMEM per TensorCore; conservative (v7x-sized) fallback."""
    try:
        cap = getattr(pltpu.get_tpu_info(), "vmem_capacity_bytes", None)
        if cap:
            return int(cap)
    except Exception:
        pass
    return 64 * 1024 * 1024


# ----------------------------- Pallas kernel ------------------------------ #

def _resblock1_kernel(xb_ref, xl_ref, xr_ref, w1_ref, b1_ref, w2_ref, b2_ref,
                      o_ref, *, ksize, l_tile, halo, seq_len, compute_dtype):
    """Fused ResBlock1 forward for one (batch, L-tile) grid step.

    xb_ref : (l_tile, Cp)    body rows of the window
    xl_ref : (halo,   Cp)    left-halo rows  (clamped/garbage at sequence start)
    xr_ref : (halo,   Cp)    right-halo rows (clamped/garbage at sequence end)
    w*_ref : (3, K*Cp, Cp)   folded conv weights (whole-array VMEM residents)
    b*_ref : (3, 1, Cp)      biases (f32)
    o_ref  : (l_tile, Cp)    output tile
    """
    pad = (ksize - 1) // 2
    w_rows = l_tile + 2 * halo
    t = pl.program_id(1)
    base = t * l_tile - halo  # absolute sequence position of window row 0

    # Haloed window (W, Cp): left | body | right.  Needed in full as the f32
    # residual carrier, so the concat cannot be elided.
    window = jnp.concatenate(
        [xl_ref[...], xb_ref[...], xr_ref[...]], axis=0).astype(jnp.float32)

    # Hoisted absolute-position column (W, 1): one iota per grid step, shared by all
    # six pre-conv maskings (JAX does not CSE broadcasted iotas).
    pos_full = base + jax.lax.broadcasted_iota(jnp.int32, (w_rows, 1), 0)

    def prep(v, off):
        # Fused pointwise prologue: leaky_relu(0.1) -> zero rows whose absolute
        # position lies outside [0, seq_len) (exactly reproduces per-conv zero SAME
        # padding and neutralizes halo garbage) -> cast to the MXU operand dtype.
        p = pos_full[off:off + v.shape[0]]
        keep = (p >= 0) & (p < seq_len)
        return jnp.where(keep, jnp.maximum(v, 0.1 * v), 0.0).astype(compute_dtype)

    def conv_valid(a, w, b):
        # "valid" conv over the window: output shrinks by `pad` rows per side.
        # All K taps folded into a single (rows, K*Cp) @ (K*Cp, Cp) MXU matmul; the
        # im2col slab is built in the (bf16) operand dtype -> half the store bytes.
        rows_out = a.shape[0] - 2 * pad
        if ksize > 1:
            slab = jnp.concatenate([a[k:k + rows_out] for k in range(ksize)], axis=1)
        else:
            slab = a
        return jnp.dot(slab, w, preferred_element_type=jnp.float32) + b

    # Three (conv1, conv2) stages, fully unrolled (the window shrinks by 2*pad per
    # side per stage, so shapes differ per stage and a fori_loop is not applicable).
    x = window   # residual carrier; covers window rows [trim, W - trim)
    trim = 0
    for i in range(3):
        a = conv_valid(prep(x, trim), w1_ref[i], b1_ref[i])
        a = conv_valid(prep(a, trim + pad), w2_ref[i], b2_ref[i])
        x = a + x[2 * pad: x.shape[0] - 2 * pad]
        trim += 2 * pad

    s = halo - trim  # static; >= 0 because halo >= 6*pad (asserted in the wrapper)
    o_ref[...] = x[s:s + l_tile].astype(o_ref.dtype)


# ------------------------------- Wrappers ---------------------------------- #

def resblock1_pallas_nlc(x_nlc, w1, b1, w2, b2, *, kernel_size=3, l_tile=None,
                         matmul_dtype=jnp.bfloat16):
    """Channel-last entry point.  x_nlc: (B, L, C) f32.

    w*: (3, C_out, C_in, K) effective (weight-norm folded) weights, b*: (3, C).
    l_tile: rows of L per grid step.  None -> chosen per generation (1024 on
            128 MiB-VMEM parts, 512 on 64 MiB v7x).  Bigger tiles amortize the
            ~0.35 us per-grid-step overhead; keep within the VMEM budget.
    matmul_dtype: MXU operand dtype (bf16 default for v5e/v6e/v7x peak throughput;
            accumulation is always f32).  Pass jnp.float32 for tight-accuracy use.
    """
    B, L, C = x_nlc.shape
    K = kernel_size
    pad = (K - 1) // 2

    # Hardware-derived knobs.
    vmem_cap = _tpu_vmem_capacity_bytes()
    vmem_limit = int(vmem_cap * 0.7)          # leave headroom for compiler scratch
    if l_tile is None:
        l_tile = 512 if vmem_cap <= 64 * 1024 * 1024 else 1024

    # Lane padding: channels (lane axis) padded to a multiple of 128 so every store
    # is a full unmasked vst and MXU columns are dense.  Padded channels carry zero
    # weights/biases and are cropped from the output.
    Cp = _round_up(C, 128)

    # Halo big enough for the fused 6-conv chain, rounded to the sublane (8).
    halo = max(8, _round_up(6 * pad, 8))
    assert halo >= 6 * pad and halo % 8 == 0, "halo must cover the 6-conv receptive field"

    # Tile size: multiple of halo (hence of 8), never larger than needed.
    l_tile = max(halo, min(l_tile, _round_up(L, halo)))
    l_tile = _round_up(l_tile, halo)
    assert l_tile % halo == 0, "l_tile must be a multiple of the halo size"
    L_pad = _round_up(L, l_tile)
    n_tiles = L_pad // l_tile
    R = l_tile // halo                # halo-blocks per tile
    n_halo_blocks = L_pad // halo

    # Zero-pad L to a tile multiple and C to the lane-padded width.
    x_p = jnp.pad(x_nlc, ((0, 0), (0, L_pad - L), (0, Cp - C)))

    # Weights (layer, C_out, C_in, K) -> zero-pad channels -> (layer, K*Cp, Cp):
    # one matmul per conv, stored in the MXU operand dtype.
    def fold(w, b):
        wp = jnp.zeros((3, Cp, Cp, K), w.dtype).at[:, :C, :C, :].set(w)
        bp = jnp.zeros((3, Cp), b.dtype).at[:, :C].set(b)
        wf = jnp.transpose(wp, (0, 3, 2, 1)).reshape(3, K * Cp, Cp).astype(matmul_dtype)
        return wf, bp.reshape(3, 1, Cp).astype(jnp.float32)

    w1_f, b1_f = fold(w1, b1)
    w2_f, b2_f = fold(w2, b2)

    kernel = functools.partial(_resblock1_kernel, ksize=K, l_tile=l_tile, halo=halo,
                               seq_len=L, compute_dtype=matmul_dtype)

    # Weights/biases: whole-array, single-buffered VMEM residents.
    w_spec = pl.BlockSpec(memory_space=pltpu.MemorySpace.VMEM)

    itemsize_w = jnp.dtype(matmul_dtype).itemsize
    w_rows = l_tile + 2 * halo
    flops = int(2 * B * n_tiles * 6 * w_rows * K * Cp * Cp)
    bytes_accessed = int(B * (L_pad + 2 * n_tiles * halo) * Cp * 4   # activation reads
                         + B * L_pad * Cp * 4                        # activation writes
                         + (w1_f.size + w2_f.size) * itemsize_w
                         + (b1_f.size + b2_f.size) * 4)

    out_nlc = pl.pallas_call(
        kernel,
        out_shape=jax.ShapeDtypeStruct((B, L_pad, Cp), x_p.dtype),
        grid_spec=pltpu.PrefetchScalarGridSpec(
            num_scalar_prefetch=0,
            grid=(B, n_tiles),
            in_specs=[
                # body tile
                pl.BlockSpec((None, l_tile, Cp), lambda b, t: (b, t, 0)),
                # left halo (clamped at t == 0; masked inside the kernel)
                pl.BlockSpec((None, halo, Cp),
                             lambda b, t: (b, jnp.maximum(t * R - 1, 0), 0)),
                # right halo (clamped at the last tile; masked inside the kernel)
                pl.BlockSpec((None, halo, Cp),
                             lambda b, t: (b, jnp.minimum((t + 1) * R,
                                                          n_halo_blocks - 1), 0)),
                w_spec,   # w1
                w_spec,   # b1
                w_spec,   # w2
                w_spec,   # b2
            ],
            out_specs=pl.BlockSpec((None, l_tile, Cp), lambda b, t: (b, t, 0)),
        ),
        compiler_params=pltpu.CompilerParams(
            dimension_semantics=("parallel", "parallel"),
            vmem_limit_bytes=vmem_limit,
        ),
        cost_estimate=pl.CostEstimate(flops=flops, transcendentals=0,
                                      bytes_accessed=bytes_accessed),
    )(x_p, x_p, x_p, w1_f, b1_f, w2_f, b2_f)

    return out_nlc[:, :L, :C]   # crop L padding and lane padding


def resblock1_pallas(x_ncl, w1, b1, w2, b2, **kwargs):
    """PyTorch-layout (B, C, L) wrapper.  In a larger pipeline prefer
    resblock1_pallas_nlc and keep activations NLC to avoid the two boundary
    transposes (each is a full extra HBM read+write of the activation)."""
    y = resblock1_pallas_nlc(jnp.transpose(x_ncl, (0, 2, 1)), w1, b1, w2, b2, **kwargs)
    return jnp.transpose(y, (0, 2, 1))


# --------------------------- Parameter synthesis --------------------------- #

def make_weightnorm_conv_params(key, channels, kernel_size, n_layers=3):
    """Synthesize weight-normed Conv1d params (deterministic).

    Returns effective weights (n_layers, C_out, C_in, K) and biases (n_layers, C).
    weight_norm: w = g * v / ||v||, norm over (C_in, K) per output channel.
    """
    kv, kg, kb = jax.random.split(key, 3)
    bound = 1.0 / np.sqrt(channels * kernel_size)
    v = jax.random.uniform(
        kv, (n_layers, channels, channels, kernel_size),
        minval=-bound, maxval=bound, dtype=jnp.float32)
    g = jax.random.uniform(
        kg, (n_layers, channels), minval=0.5, maxval=1.5, dtype=jnp.float32)
    b = jax.random.uniform(
        kb, (n_layers, channels), minval=-bound, maxval=bound, dtype=jnp.float32)
    norm = jnp.sqrt(jnp.sum(v * v, axis=(2, 3), keepdims=True))
    w = g[:, :, None, None] * v / norm
    return w, b


# ------------------------------- Reference --------------------------------- #

def resblock1_reference(x_ncl, w1, b1, w2, b2):
    """Pure-JAX reference (lax.conv, highest precision) matching the PyTorch forward."""
    def conv(x, w, b):
        y = jax.lax.conv_general_dilated(
            x, w, window_strides=(1,), padding="SAME",
            dimension_numbers=("NCH", "OIH", "NCH"),
            precision=jax.lax.Precision.HIGHEST)
        return y + b[None, :, None]

    x = x_ncl
    for i in range(3):
        xt = jax.nn.leaky_relu(x, 0.1)
        xt = conv(xt, w1[i], b1[i])
        xt = jax.nn.leaky_relu(xt, 0.1)
        xt = conv(xt, w2[i], b2[i])
        x = xt + x
    return x


# ---------------------------------- Main ----------------------------------- #

if __name__ == "__main__":
    root = jax.random.PRNGKey(0)
    k_small, k_big = jax.random.split(root)

    # --- Test 1: module-spec small shapes (B=2, C=4, L=16), f32 path, tight tol. ---
    B, C, L, K = 2, 4, 16, 3
    kx, k1, k2 = jax.random.split(k_small, 3)
    x = jax.random.normal(kx, (B, C, L), dtype=jnp.float32)
    w1, b1 = make_weightnorm_conv_params(k1, C, K)
    w2, b2 = make_weightnorm_conv_params(k2, C, K)

    ref = jax.block_until_ready(resblock1_reference(x, w1, b1, w2, b2))
    out = jax.block_until_ready(
        resblock1_pallas(x, w1, b1, w2, b2, kernel_size=K,
                         matmul_dtype=jnp.float32))
    if not np.allclose(np.asarray(out), np.asarray(ref), rtol=1e-4, atol=1e-4):
        raise AssertionError("Pallas ResBlock1 mismatch vs reference (small, f32)")

    # Default (bf16 operands, lane-padded C=4 -> 128) path at the spec shape.
    out_d = jax.block_until_ready(resblock1_pallas(x, w1, b1, w2, b2, kernel_size=K))
    if not np.allclose(np.asarray(out_d), np.asarray(ref), rtol=1e-1, atol=1e-1):
        raise AssertionError("Pallas ResBlock1 bf16-default mismatch (small shapes)")

    # --- Test 2: tiled path with halos/masking (C=128, L=500), f32, tight tol.
    #     l_tile=128 is deliberately tiny to exercise 4 tiles + halos + crop; it is a
    #     correctness setting, not a performance one (default tile is 512/1024). ---
    B2, C2, L2 = 2, 128, 500
    kx2, k12, k22 = jax.random.split(k_big, 3)
    x2 = jax.random.normal(kx2, (B2, C2, L2), dtype=jnp.float32)
    w12, b12 = make_weightnorm_conv_params(k12, C2, K)
    w22, b22 = make_weightnorm_conv_params(k22, C2, K)

    ref2 = jax.block_until_ready(resblock1_reference(x2, w12, b12, w22, b22))
    out2 = jax.block_until_ready(
        resblock1_pallas(x2, w12, b12, w22, b22, kernel_size=K, l_tile=128,
                         matmul_dtype=jnp.float32))
    if not np.allclose(np.asarray(out2), np.asarray(ref2), rtol=1e-3, atol=1e-3):
        raise AssertionError("Pallas ResBlock1 mismatch vs reference (tiled, f32)")

    # --- Test 3: default bf16 MXU-operand path + per-generation default l_tile,
    #             accuracy-checked against the f32 reference (loose tolerance). ---
    out3 = jax.block_until_ready(
        resblock1_pallas(x2, w12, b12, w22, b22, kernel_size=K))
    out3_np = np.asarray(out3)
    if not np.all(np.isfinite(out3_np)):
        raise AssertionError("bf16-operand path produced non-finite values")
    if not np.allclose(out3_np, np.asarray(ref2), rtol=1e-1, atol=1.5e-1):
        raise AssertionError("bf16-operand path inaccurate vs f32 reference")

    print("KERNEL_OK")
</pallas_src>

<mosaic_0001>
module attributes {stable_mosaic.version = 11 : i64} {
  func.func @_resblock1_kernel(%arg0: i32, %arg1: i32, %arg2: memref<1x16x128xf32, #tpu.memory_space<vmem>>, %arg3: memref<1x8x128xf32, #tpu.memory_space<vmem>>, %arg4: memref<1x8x128xf32, #tpu.memory_space<vmem>>, %arg5: memref<3x384x128xf32, #tpu.memory_space<vmem>>, %arg6: memref<3x1x128xf32, #tpu.memory_space<vmem>>, %arg7: memref<3x384x128xf32, #tpu.memory_space<vmem>>, %arg8: memref<3x1x128xf32, #tpu.memory_space<vmem>>, %arg9: memref<1x16x128xf32, #tpu.memory_space<vmem>>) attributes {dimension_semantics = [#tpu.dimension_semantics<parallel>, #tpu.dimension_semantics<parallel>], iteration_bounds = array<i64: 2, 1>, scalar_prefetch = 0 : i64, scratch_operands = 0 : i64, tpu.core_type = #tpu.core_type<tc>, window_params = [{transform_indices = @transform_0, window_bounds = array<i64: 1, 16, 128>}, {transform_indices = @transform_1, window_bounds = array<i64: 1, 8, 128>}, {transform_indices = @transform_2, window_bounds = array<i64: 1, 8, 128>}, {pipeline_mode = #tpu.pipeline_mode<synchronous>, transform_indices = @transform_3, window_bounds = array<i64: 3, 384, 128>}, {pipeline_mode = #tpu.pipeline_mode<synchronous>, transform_indices = @transform_4, window_bounds = array<i64: 3, 1, 128>}, {pipeline_mode = #tpu.pipeline_mode<synchronous>, transform_indices = @transform_5, window_bounds = array<i64: 3, 384, 128>}, {pipeline_mode = #tpu.pipeline_mode<synchronous>, transform_indices = @transform_6, window_bounds = array<i64: 3, 1, 128>}, {transform_indices = @transform_7, window_bounds = array<i64: 1, 16, 128>}]} {
    %c16_i32 = arith.constant 16 : i32
    %0 = arith.muli %arg1, %c16_i32 : i32
    %c8_i32 = arith.constant 8 : i32
    %1 = arith.subi %0, %c8_i32 : i32
    %c0 = arith.constant 0 : index
    %c0_0 = arith.constant 0 : index
    %c0_1 = arith.constant 0 : index
    %2 = vector.load %arg3[%c0, %c0_0, %c0_1] : memref<1x8x128xf32, #tpu.memory_space<vmem>>, vector<1x8x128xf32>
    %3 = vector.shape_cast %2 : vector<1x8x128xf32> to vector<8x128xf32>
    %c0_2 = arith.constant 0 : index
    %c0_3 = arith.constant 0 : index
    %c0_4 = arith.constant 0 : index
    %4 = vector.load %arg2[%c0_2, %c0_3, %c0_4] : memref<1x16x128xf32, #tpu.memory_space<vmem>>, vector<1x16x128xf32>
    %5 = vector.shape_cast %4 : vector<1x16x128xf32> to vector<16x128xf32>
    %c0_5 = arith.constant 0 : index
    %c0_6 = arith.constant 0 : index
    %c0_7 = arith.constant 0 : index
    %6 = vector.load %arg4[%c0_5, %c0_6, %c0_7] : memref<1x8x128xf32, #tpu.memory_space<vmem>>, vector<1x8x128xf32>
    %7 = vector.shape_cast %6 : vector<1x8x128xf32> to vector<8x128xf32>
    %8 = tpu.concatenate %3, %5, %7 in 0 : vector<8x128xf32>, vector<16x128xf32>, vector<8x128xf32> -> vector<32x128xf32>
    %9 = tpu.iota {dimensions = array<i32: 0>} : vector<32x1xi32>
    %10 = vector.broadcast %1 : i32 to vector<32x1xi32>
    %11 = arith.addi %10, %9 : vector<32x1xi32>
    %c0_i32 = arith.constant 0 : i32
    %12 = vector.broadcast %c0_i32 : i32 to vector<32x1xi32>
    %13 = arith.cmpi sge, %11, %12 : vector<32x1xi32>
    %c16_i32_8 = arith.constant 16 : i32
    %14 = vector.broadcast %c16_i32_8 : i32 to vector<32x1xi32>
    %15 = arith.cmpi slt, %11, %14 : vector<32x1xi32>
    %16 = arith.andi %13, %15 : vector<32x1xi1>
    %cst = arith.constant 1.000000e-01 : f32
    %17 = vector.broadcast %cst : f32 to vector<32x128xf32>
    %18 = arith.mulf %17, %8 : vector<32x128xf32>
    %19 = arith.maximumf %8, %18 : vector<32x128xf32>
    %cst_9 = arith.constant 0.000000e+00 : f32
    %20 = vector.shape_cast %16 : vector<32x1xi1> to vector<32x1xi1>
    %21 = vector.broadcast %20 : vector<32x1xi1> to vector<32x128xi1>
    %22 = vector.broadcast %cst_9 : f32 to vector<32x128xf32>
    %23 = arith.select %21, %19, %22 : vector<32x128xi1>, vector<32x128xf32>
    %c0_10 = arith.constant 0 : index
    %c0_11 = arith.constant 0 : index
    %c0_12 = arith.constant 0 : index
    %24 = vector.load %arg5[%c0_10, %c0_11, %c0_12] : memref<3x384x128xf32, #tpu.memory_space<vmem>>, vector<1x384x128xf32>
    %25 = vector.shape_cast %24 : vector<1x384x128xf32> to vector<384x128xf32>
    %c0_13 = arith.constant 0 : index
    %c0_14 = arith.constant 0 : index
    %c0_15 = arith.constant 0 : index
    %26 = vector.load %arg6[%c0_13, %c0_14, %c0_15] : memref<3x1x128xf32, #tpu.memory_space<vmem>>, vector<1x1x128xf32>
    %27 = vector.shape_cast %26 : vector<1x1x128xf32> to vector<1x128xf32>
    %28 = vector.extract_strided_slice %23 {offsets = [0, 0], sizes = [30, 128], strides = [1, 1]} : vector<32x128xf32> to vector<30x128xf32>
    %29 = vector.extract_strided_slice %23 {offsets = [1, 0], sizes = [30, 128], strides = [1, 1]} : vector<32x128xf32> to vector<30x128xf32>
    %30 = vector.extract_strided_slice %23 {offsets = [2, 0], sizes = [30, 128], strides = [1, 1]} : vector<32x128xf32> to vector<30x128xf32>
    %31 = tpu.concatenate %28, %29, %30 in 1 : vector<30x128xf32>, vector<30x128xf32>, vector<30x128xf32> -> vector<30x384xf32>
    %cst_16 = arith.constant dense<0.000000e+00> : vector<30x128xf32>
    %32 = tpu.matmul %31, %25, %cst_16 {dimension_numbers = #tpu.dot_dimension_numbers<[1], [0], [0], [1], [0, 0, 1, 1], [], []>} : vector<30x384xf32>, vector<384x128xf32>, vector<30x128xf32> -> vector<30x128xf32>
    %33 = vector.broadcast %27 : vector<1x128xf32> to vector<30x128xf32>
    %34 = arith.addf %32, %33 : vector<30x128xf32>
    %35 = vector.extract_strided_slice %11 {offsets = [1, 0], sizes = [30, 1], strides = [1, 1]} : vector<32x1xi32> to vector<30x1xi32>
    %c0_i32_17 = arith.constant 0 : i32
    %36 = vector.broadcast %c0_i32_17 : i32 to vector<30x1xi32>
    %37 = arith.cmpi sge, %35, %36 : vector<30x1xi32>
    %c16_i32_18 = arith.constant 16 : i32
    %38 = vector.broadcast %c16_i32_18 : i32 to vector<30x1xi32>
    %39 = arith.cmpi slt, %35, %38 : vector<30x1xi32>
    %40 = arith.andi %37, %39 : vector<30x1xi1>
    %cst_19 = arith.constant 1.000000e-01 : f32
    %41 = vector.broadcast %cst_19 : f32 to vector<30x128xf32>
    %42 = arith.mulf %41, %34 : vector<30x128xf32>
    %43 = arith.maximumf %34, %42 : vector<30x128xf32>
    %cst_20 = arith.constant 0.000000e+00 : f32
    %44 = vector.shape_cast %40 : vector<30x1xi1> to vector<30x1xi1>
    %45 = vector.broadcast %44 : vector<30x1xi1> to vector<30x128xi1>
    %46 = vector.broadcast %cst_20 : f32 to vector<30x128xf32>
    %47 = arith.select %45, %43, %46 : vector<30x128xi1>, vector<30x128xf32>
    %c0_21 = arith.constant 0 : index
    %c0_22 = arith.constant 0 : index
    %c0_23 = arith.constant 0 : index
    %48 = vector.load %arg7[%c0_21, %c0_22, %c0_23] : memref<3x384x128xf32, #tpu.memory_space<vmem>>, vector<1x384x128xf32>
    %49 = vector.shape_cast %48 : vector<1x384x128xf32> to vector<384x128xf32>
    %c0_24 = arith.constant 0 : index
    %c0_25 = arith.constant 0 : index
    %c0_26 = arith.constant 0 : index
    %50 = vector.load %arg8[%c0_24, %c0_25, %c0_26] : memref<3x1x128xf32, #tpu.memory_space<vmem>>, vector<1x1x128xf32>
    %51 = vector.shape_cast %50 : vector<1x1x128xf32> to vector<1x128xf32>
    %52 = vector.extract_strided_slice %47 {offsets = [0, 0], sizes = [28, 128], strides = [1, 1]} : vector<30x128xf32> to vector<28x128xf32>
    %53 = vector.extract_strided_slice %47 {offsets = [1, 0], sizes = [28, 128], strides = [1, 1]} : vector<30x128xf32> to vector<28x128xf32>
    %54 = vector.extract_strided_slice %47 {offsets = [2, 0], sizes = [28, 128], strides = [1, 1]} : vector<30x128xf32> to vector<28x128xf32>
    %55 = tpu.concatenate %52, %53, %54 in 1 : vector<28x128xf32>, vector<28x128xf32>, vector<28x128xf32> -> vector<28x384xf32>
    %cst_27 = arith.constant dense<0.000000e+00> : vector<28x128xf32>
    %56 = tpu.matmul %55, %49, %cst_27 {dimension_numbers = #tpu.dot_dimension_numbers<[1], [0], [0], [1], [0, 0, 1, 1], [], []>} : vector<28x384xf32>, vector<384x128xf32>, vector<28x128xf32> -> vector<28x128xf32>
    %57 = vector.broadcast %51 : vector<1x128xf32> to vector<28x128xf32>
    %58 = arith.addf %56, %57 : vector<28x128xf32>
    %59 = vector.extract_strided_slice %8 {offsets = [2, 0], sizes = [28, 128], strides = [1, 1]} : vector<32x128xf32> to vector<28x128xf32>
    %60 = arith.addf %58, %59 : vector<28x128xf32>
    %61 = vector.extract_strided_slice %11 {offsets = [2, 0], sizes = [28, 1], strides = [1, 1]} : vector<32x1xi32> to vector<28x1xi32>
    %c0_i32_28 = arith.constant 0 : i32
    %62 = vector.broadcast %c0_i32_28 : i32 to vector<28x1xi32>
    %63 = arith.cmpi sge, %61, %62 : vector<28x1xi32>
    %c16_i32_29 = arith.constant 16 : i32
    %64 = vector.broadcast %c16_i32_29 : i32 to vector<28x1xi32>
    %65 = arith.cmpi slt, %61, %64 : vector<28x1xi32>
    %66 = arith.andi %63, %65 : vector<28x1xi1>
    %cst_30 = arith.constant 1.000000e-01 : f32
    %67 = vector.broadcast %cst_30 : f32 to vector<28x128xf32>
    %68 = arith.mulf %67, %60 : vector<28x128xf32>
    %69 = arith.maximumf %60, %68 : vector<28x128xf32>
    %cst_31 = arith.constant 0.000000e+00 : f32
    %70 = vector.shape_cast %66 : vector<28x1xi1> to vector<28x1xi1>
    %71 = vector.broadcast %70 : vector<28x1xi1> to vector<28x128xi1>
    %72 = vector.broadcast %cst_31 : f32 to vector<28x128xf32>
    %73 = arith.select %71, %69, %72 : vector<28x128xi1>, vector<28x128xf32>
    %c1 = arith.constant 1 : index
    %c0_32 = arith.constant 0 : index
    %c0_33 = arith.constant 0 : index
    %74 = vector.load %arg5[%c1, %c0_32, %c0_33] : memref<3x384x128xf32, #tpu.memory_space<vmem>>, vector<1x384x128xf32>
    %75 = vector.shape_cast %74 : vector<1x384x128xf32> to vector<384x128xf32>
    %c1_34 = arith.constant 1 : index
    %c0_35 = arith.constant 0 : index
    %c0_36 = arith.constant 0 : index
    %76 = vector.load %arg6[%c1_34, %c0_35, %c0_36] : memref<3x1x128xf32, #tpu.memory_space<vmem>>, vector<1x1x128xf32>
    %77 = vector.shape_cast %76 : vector<1x1x128xf32> to vector<1x128xf32>
    %78 = vector.extract_strided_slice %73 {offsets = [0, 0], sizes = [26, 128], strides = [1, 1]} : vector<28x128xf32> to vector<26x128xf32>
    %79 = vector.extract_strided_slice %73 {offsets = [1, 0], sizes = [26, 128], strides = [1, 1]} : vector<28x128xf32> to vector<26x128xf32>
    %80 = vector.extract_strided_slice %73 {offsets = [2, 0], sizes = [26, 128], strides = [1, 1]} : vector<28x128xf32> to vector<26x128xf32>
    %81 = tpu.concatenate %78, %79, %80 in 1 : vector<26x128xf32>, vector<26x128xf32>, vector<26x128xf32> -> vector<26x384xf32>
    %cst_37 = arith.constant dense<0.000000e+00> : vector<26x128xf32>
    %82 = tpu.matmul %81, %75, %cst_37 {dimension_numbers = #tpu.dot_dimension_numbers<[1], [0], [0], [1], [0, 0, 1, 1], [], []>} : vector<26x384xf32>, vector<384x128xf32>, vector<26x128xf32> -> vector<26x128xf32>
    %83 = vector.broadcast %77 : vector<1x128xf32> to vector<26x128xf32>
    %84 = arith.addf %82, %83 : vector<26x128xf32>
    %85 = vector.extract_strided_slice %11 {offsets = [3, 0], sizes = [26, 1], strides = [1, 1]} : vector<32x1xi32> to vector<26x1xi32>
    %c0_i32_38 = arith.constant 0 : i32
    %86 = vector.broadcast %c0_i32_38 : i32 to vector<26x1xi32>
    %87 = arith.cmpi sge, %85, %86 : vector<26x1xi32>
    %c16_i32_39 = arith.constant 16 : i32
    %88 = vector.broadcast %c16_i32_39 : i32 to vector<26x1xi32>
    %89 = arith.cmpi slt, %85, %88 : vector<26x1xi32>
    %90 = arith.andi %87, %89 : vector<26x1xi1>
    %cst_40 = arith.constant 1.000000e-01 : f32
    %91 = vector.broadcast %cst_40 : f32 to vector<26x128xf32>
    %92 = arith.mulf %91, %84 : vector<26x128xf32>
    %93 = arith.maximumf %84, %92 : vector<26x128xf32>
    %cst_41 = arith.constant 0.000000e+00 : f32
    %94 = vector.shape_cast %90 : vector<26x1xi1> to vector<26x1xi1>
    %95 = vector.broadcast %94 : vector<26x1xi1> to vector<26x128xi1>
    %96 = vector.broadcast %cst_41 : f32 to vector<26x128xf32>
    %97 = arith.select %95, %93, %96 : vector<26x128xi1>, vector<26x128xf32>
    %c1_42 = arith.constant 1 : index
    %c0_43 = arith.constant 0 : index
    %c0_44 = arith.constant 0 : index
    %98 = vector.load %arg7[%c1_42, %c0_43, %c0_44] : memref<3x384x128xf32, #tpu.memory_space<vmem>>, vector<1x384x128xf32>
    %99 = vector.shape_cast %98 : vector<1x384x128xf32> to vector<384x128xf32>
    %c1_45 = arith.constant 1 : index
    %c0_46 = arith.constant 0 : index
    %c0_47 = arith.constant 0 : index
    %100 = vector.load %arg8[%c1_45, %c0_46, %c0_47] : memref<3x1x128xf32, #tpu.memory_space<vmem>>, vector<1x1x128xf32>
    %101 = vector.shape_cast %100 : vector<1x1x128xf32> to vector<1x128xf32>
    %102 = vector.extract_strided_slice %97 {offsets = [0, 0], sizes = [24, 128], strides = [1, 1]} : vector<26x128xf32> to vector<24x128xf32>
    %103 = vector.extract_strided_slice %97 {offsets = [1, 0], sizes = [24, 128], strides = [1, 1]} : vector<26x128xf32> to vector<24x128xf32>
    %104 = vector.extract_strided_slice %97 {offsets = [2, 0], sizes = [24, 128], strides = [1, 1]} : vector<26x128xf32> to vector<24x128xf32>
    %105 = tpu.concatenate %102, %103, %104 in 1 : vector<24x128xf32>, vector<24x128xf32>, vector<24x128xf32> -> vector<24x384xf32>
    %cst_48 = arith.constant dense<0.000000e+00> : vector<24x128xf32>
    %106 = tpu.matmul %105, %99, %cst_48 {dimension_numbers = #tpu.dot_dimension_numbers<[1], [0], [0], [1], [0, 0, 1, 1], [], []>} : vector<24x384xf32>, vector<384x128xf32>, vector<24x128xf32> -> vector<24x128xf32>
    %107 = vector.broadcast %101 : vector<1x128xf32> to vector<24x128xf32>
    %108 = arith.addf %106, %107 : vector<24x128xf32>
    %109 = vector.extract_strided_slice %60 {offsets = [2, 0], sizes = [24, 128], strides = [1, 1]} : vector<28x128xf32> to vector<24x128xf32>
    %110 = arith.addf %108, %109 : vector<24x128xf32>
    %111 = vector.extract_strided_slice %11 {offsets = [4, 0], sizes = [24, 1], strides = [1, 1]} : vector<32x1xi32> to vector<24x1xi32>
    %c0_i32_49 = arith.constant 0 : i32
    %112 = vector.broadcast %c0_i32_49 : i32 to vector<24x1xi32>
    %113 = arith.cmpi sge, %111, %112 : vector<24x1xi32>
    %c16_i32_50 = arith.constant 16 : i32
    %114 = vector.broadcast %c16_i32_50 : i32 to vector<24x1xi32>
    %115 = arith.cmpi slt, %111, %114 : vector<24x1xi32>
    %116 = arith.andi %113, %115 : vector<24x1xi1>
    %cst_51 = arith.constant 1.000000e-01 : f32
    %117 = vector.broadcast %cst_51 : f32 to vector<24x128xf32>
    %118 = arith.mulf %117, %110 : vector<24x128xf32>
    %119 = arith.maximumf %110, %118 : vector<24x128xf32>
    %cst_52 = arith.constant 0.000000e+00 : f32
    %120 = vector.shape_cast %116 : vector<24x1xi1> to vector<24x1xi1>
    %121 = vector.broadcast %120 : vector<24x1xi1> to vector<24x128xi1>
    %122 = vector.broadcast %cst_52 : f32 to vector<24x128xf32>
    %123 = arith.select %121, %119, %122 : vector<24x128xi1>, vector<24x128xf32>
    %c2 = arith.constant 2 : index
    %c0_53 = arith.constant 0 : index
    %c0_54 = arith.constant 0 : index
    %124 = vector.load %arg5[%c2, %c0_53, %c0_54] : memref<3x384x128xf32, #tpu.memory_space<vmem>>, vector<1x384x128xf32>
    %125 = vector.shape_cast %124 : vector<1x384x128xf32> to vector<384x128xf32>
    %c2_55 = arith.constant 2 : index
    %c0_56 = arith.constant 0 : index
    %c0_57 = arith.constant 0 : index
    %126 = vector.load %arg6[%c2_55, %c0_56, %c0_57] : memref<3x1x128xf32, #tpu.memory_space<vmem>>, vector<1x1x128xf32>
    %127 = vector.shape_cast %126 : vector<1x1x128xf32> to vector<1x128xf32>
    %128 = vector.extract_strided_slice %123 {offsets = [0, 0], sizes = [22, 128], strides = [1, 1]} : vector<24x128xf32> to vector<22x128xf32>
    %129 = vector.extract_strided_slice %123 {offsets = [1, 0], sizes = [22, 128], strides = [1, 1]} : vector<24x128xf32> to vector<22x128xf32>
    %130 = vector.extract_strided_slice %123 {offsets = [2, 0], sizes = [22, 128], strides = [1, 1]} : vector<24x128xf32> to vector<22x128xf32>
    %131 = tpu.concatenate %128, %129, %130 in 1 : vector<22x128xf32>, vector<22x128xf32>, vector<22x128xf32> -> vector<22x384xf32>
    %cst_58 = arith.constant dense<0.000000e+00> : vector<22x128xf32>
    %132 = tpu.matmul %131, %125, %cst_58 {dimension_numbers = #tpu.dot_dimension_numbers<[1], [0], [0], [1], [0, 0, 1, 1], [], []>} : vector<22x384xf32>, vector<384x128xf32>, vector<22x128xf32> -> vector<22x128xf32>
    %133 = vector.broadcast %127 : vector<1x128xf32> to vector<22x128xf32>
    %134 = arith.addf %132, %133 : vector<22x128xf32>
    %135 = vector.extract_strided_slice %11 {offsets = [5, 0], sizes = [22, 1], strides = [1, 1]} : vector<32x1xi32> to vector<22x1xi32>
    %c0_i32_59 = arith.constant 0 : i32
    %136 = vector.broadcast %c0_i32_59 : i32 to vector<22x1xi32>
    %137 = arith.cmpi sge, %135, %136 : vector<22x1xi32>
    %c16_i32_60 = arith.constant 16 : i32
    %138 = vector.broadcast %c16_i32_60 : i32 to vector<22x1xi32>
    %139 = arith.cmpi slt, %135, %138 : vector<22x1xi32>
    %140 = arith.andi %137, %139 : vector<22x1xi1>
    %cst_61 = arith.constant 1.000000e-01 : f32
    %141 = vector.broadcast %cst_61 : f32 to vector<22x128xf32>
    %142 = arith.mulf %141, %134 : vector<22x128xf32>
    %143 = arith.maximumf %134, %142 : vector<22x128xf32>
    %cst_62 = arith.constant 0.000000e+00 : f32
    %144 = vector.shape_cast %140 : vector<22x1xi1> to vector<22x1xi1>
    %145 = vector.broadcast %144 : vector<22x1xi1> to vector<22x128xi1>
    %146 = vector.broadcast %cst_62 : f32 to vector<22x128xf32>
    %147 = arith.select %145, %143, %146 : vector<22x128xi1>, vector<22x128xf32>
    %c2_63 = arith.constant 2 : index
    %c0_64 = arith.constant 0 : index
    %c0_65 = arith.constant 0 : index
    %148 = vector.load %arg7[%c2_63, %c0_64, %c0_65] : memref<3x384x128xf32, #tpu.memory_space<vmem>>, vector<1x384x128xf32>
    %149 = vector.shape_cast %148 : vector<1x384x128xf32> to vector<384x128xf32>
    %c2_66 = arith.constant 2 : index
    %c0_67 = arith.constant 0 : index
    %c0_68 = arith.constant 0 : index
    %150 = vector.load %arg8[%c2_66, %c0_67, %c0_68] : memref<3x1x128xf32, #tpu.memory_space<vmem>>, vector<1x1x128xf32>
    %151 = vector.shape_cast %150 : vector<1x1x128xf32> to vector<1x128xf32>
    %152 = vector.extract_strided_slice %147 {offsets = [0, 0], sizes = [20, 128], strides = [1, 1]} : vector<22x128xf32> to vector<20x128xf32>
    %153 = vector.extract_strided_slice %147 {offsets = [1, 0], sizes = [20, 128], strides = [1, 1]} : vector<22x128xf32> to vector<20x128xf32>
    %154 = vector.extract_strided_slice %147 {offsets = [2, 0], sizes = [20, 128], strides = [1, 1]} : vector<22x128xf32> to vector<20x128xf32>
    %155 = tpu.concatenate %152, %153, %154 in 1 : vector<20x128xf32>, vector<20x128xf32>, vector<20x128xf32> -> vector<20x384xf32>
    %cst_69 = arith.constant dense<0.000000e+00> : vector<20x128xf32>
    %156 = tpu.matmul %155, %149, %cst_69 {dimension_numbers = #tpu.dot_dimension_numbers<[1], [0], [0], [1], [0, 0, 1, 1], [], []>} : vector<20x384xf32>, vector<384x128xf32>, vector<20x128xf32> -> vector<20x128xf32>
    %157 = vector.broadcast %151 : vector<1x128xf32> to vector<20x128xf32>
    %158 = arith.addf %156, %157 : vector<20x128xf32>
    %159 = vector.extract_strided_slice %110 {offsets = [2, 0], sizes = [20, 128], strides = [1, 1]} : vector<24x128xf32> to vector<20x128xf32>
    %160 = arith.addf %158, %159 : vector<20x128xf32>
    %161 = vector.extract_strided_slice %160 {offsets = [2, 0], sizes = [16, 128], strides = [1, 1]} : vector<20x128xf32> to vector<16x128xf32>
    %c0_70 = arith.constant 0 : index
    %c0_71 = arith.constant 0 : index
    %c0_72 = arith.constant 0 : index
    %162 = vector.load %arg9[%c0_70, %c0_71, %c0_72] : memref<1x16x128xf32, #tpu.memory_space<vmem>>, vector<1x16x128xf32>
    %163 = vector.shape_cast %162 : vector<1x16x128xf32> to vector<16x128xf32>
    %164 = vector.shape_cast %161 : vector<16x128xf32> to vector<1x16x128xf32>
    tpu.vector_store %arg9[%c0_70, %c0_71, %c0_72], %164 {strides = array<i32>} : memref<1x16x128xf32, #tpu.memory_space<vmem>>, vector<1x16x128xf32>,
    return
  }
  func.func @transform_0(%arg0: i32, %arg1: i32) -> (i32, i32, i32) {
    %c0_i32 = arith.constant 0 : i32
    %c0_i32_0 = arith.constant 0 : i32
    return %arg0, %arg1, %c0_i32 : i32, i32, i32
  }
  func.func @transform_1(%arg0: i32, %arg1: i32) -> (i32, i32, i32) {
    %c2_i32 = arith.constant 2 : i32
    %0 = arith.muli %arg1, %c2_i32 : i32
    %c1_i32 = arith.constant 1 : i32
    %1 = arith.subi %0, %c1_i32 : i32
    %c0_i32 = arith.constant 0 : i32
    %2 = arith.maxsi %1, %c0_i32 : i32
    %c0_i32_0 = arith.constant 0 : i32
    %c0_i32_1 = arith.constant 0 : i32
    return %arg0, %2, %c0_i32_0 : i32, i32, i32
  }
  func.func @transform_2(%arg0: i32, %arg1: i32) -> (i32, i32, i32) {
    %c1_i32 = arith.constant 1 : i32
    %0 = arith.addi %arg1, %c1_i32 : i32
    %c2_i32 = arith.constant 2 : i32
    %1 = arith.muli %0, %c2_i32 : i32
    %c1_i32_0 = arith.constant 1 : i32
    %2 = arith.minsi %1, %c1_i32_0 : i32
    %c0_i32 = arith.constant 0 : i32
    %c0_i32_1 = arith.constant 0 : i32
    return %arg0, %2, %c0_i32 : i32, i32, i32
  }
  func.func @transform_3(%arg0: i32, %arg1: i32) -> (i32, i32, i32) {
    %c0_i32 = arith.constant 0 : i32
    %c0_i32_0 = arith.constant 0 : i32
    %c0_i32_1 = arith.constant 0 : i32
    %c0_i32_2 = arith.constant 0 : i32
    return %c0_i32, %c0_i32_0, %c0_i32_1 : i32, i32, i32
  }
  func.func @transform_4(%arg0: i32, %arg1: i32) -> (i32, i32, i32) {
    %c0_i32 = arith.constant 0 : i32
    %c0_i32_0 = arith.constant 0 : i32
    %c0_i32_1 = arith.constant 0 : i32
    %c0_i32_2 = arith.constant 0 : i32
    return %c0_i32, %c0_i32_0, %c0_i32_1 : i32, i32, i32
  }
  func.func @transform_5(%arg0: i32, %arg1: i32) -> (i32, i32, i32) {
    %c0_i32 = arith.constant 0 : i32
    %c0_i32_0 = arith.constant 0 : i32
    %c0_i32_1 = arith.constant 0 : i32
    %c0_i32_2 = arith.constant 0 : i32
    return %c0_i32, %c0_i32_0, %c0_i32_1 : i32, i32, i32
  }
  func.func @transform_6(%arg0: i32, %arg1: i32) -> (i32, i32, i32) {
    %c0_i32 = arith.constant 0 : i32
    %c0_i32_0 = arith.constant 0 : i32
    %c0_i32_1 = arith.constant 0 : i32
    %c0_i32_2 = arith.constant 0 : i32
    return %c0_i32, %c0_i32_0, %c0_i32_1 : i32, i32, i32
  }
  func.func @transform_7(%arg0: i32, %arg1: i32) -> (i32, i32, i32) {
    %c0_i32 = arith.constant 0 : i32
    %c0_i32_0 = arith.constant 0 : i32
    return %arg0, %arg1, %c0_i32 : i32, i32, i32
  }
}

</mosaic_0001>

<llo_original>
// kernel: tpu_custom_call.1
$region0: #{tpu_custom_call.1}
  #allocation0 [shape = 'u32[]', space=smem, size = 0x4, offset = 0x4, fixed_abs, tag = 'smem constant byte address 0x4 - core index']
  #allocation1 [shape = 'u32[72,128]{1,0:T(1,128)}', space=vmem, size = 0x9000, scoped, tag = 'internal scratch']
  %s0 = inlined_call_operand.hbm [shape: f32[2,16,128], index: 0, kind: input, shape index: {}]
  %s1 = inlined_call_operand.hbm [shape: f32[2,16,128], index: 1, kind: input, shape index: {}]
  %s2 = inlined_call_operand.hbm [shape: f32[2,16,128], index: 2, kind: input, shape index: {}]
  %s3 = inlined_call_operand.hbm [shape: f32[3,384,128], index: 3, kind: input, shape index: {}]
  %s4 = inlined_call_operand.vmem [shape: f32[3,1,128], index: 4, kind: input, shape index: {}]
  %s5 = inlined_call_operand.hbm [shape: f32[3,384,128], index: 5, kind: input, shape index: {}]
  %s6 = inlined_call_operand.hbm [shape: f32[3,1,128], index: 6, kind: input, shape index: {}]
  %s7 = inlined_call_operand.hbm [shape: f32[2,16,128], index: 7, kind: output, shape index: {}]
  %s8 = sld [smem:[#allocation0]]
  $region85: #{tpu_custom_call.1} parent=0
    _
  %s10 = ssub.s32 1, %s8
  %s11 = scalar_select 0, %s10, %s8
  $region1: #{tpu_custom_call.1} parent=0
    #allocation2 [shape = 'u8[16384]{0}', space=vmem, size = 0x4000, scoped, tag = 'input window, operand 0']
    #allocation3 [shape = 's32[2]{0}', space=sflag, size = 0x8, scoped, tag = 'scoped memory for tpu_custom_call.1']
    #allocation4 [shape = 's32[2]{0}', space=sflag, size = 0x8, scoped, tag = 'scoped memory for tpu_custom_call.1']
    #allocation5 [shape = 'u8[8192]{0}', space=vmem, size = 0x2000, scoped, tag = 'input window, operand 1']
    #allocation6 [shape = 's32[2]{0}', space=sflag, size = 0x8, scoped, tag = 'scoped memory for tpu_custom_call.1']
    #allocation7 [shape = 'u8[8192]{0}', space=vmem, size = 0x2000, scoped, tag = 'input window, operand 2']
    #allocation8 [shape = 'u8[589824]{0}', space=vmem, size = 0x90000, scoped, tag = 'input window, operand 3, single buffered']
    #allocation9 [shape = 's32[1]{0}', space=sflag, size = 0x4, scoped, tag = 'scoped memory for tpu_custom_call.1']
    #allocation10 [shape = 'u8[589824]{0}', space=vmem, size = 0x90000, scoped, tag = 'input window, operand 5, single buffered']
    #allocation11 [shape = 'u8[1536]{0}', space=vmem, size = 0x800, scoped, tag = 'input window, operand 6, single buffered']
    #allocation12 [shape = 's32[1]{0}', space=sflag, size = 0x4, scoped, tag = 'scoped memory for tpu_custom_call.1']
    #allocation13 [shape = 'u8[16384]{0}', space=vmem, size = 0x4000, scoped, tag = 'output window, operand 0']
    %12 = vsyncpa [#allocation3], 0
    %s13 = scalar_lea.sflag [#allocation3], 1
    %14 = vsyncpa %s13, 0
    %15 = vsyncpa [#allocation6], 0
    %s16 = scalar_lea.sflag [#allocation6], 1
    %17 = vsyncpa %s16, 0
    %18 = vsyncpa [#allocation9], 0
    %19 = vsyncpa [#allocation12], 0
    %20 = vsyncpa [#allocation4], 0
    %s21 = scalar_lea.sflag [#allocation4], 1
    %22 = vsyncpa %s21, 0
    loop: start=0, step=1, limit=4
    $region2: #{tpu_custom_call.1} parent=1 // loop_pre_header
      _
    $region3: #{tpu_custom_call.1} parent=1 // loop_header
      %s24 = sphi 0, %s28
      %p25 = scmp.ge.s32.totalorder %s24, 4
      %s31 = sphi 0, %s43
      %s32 = sphi 0, %s39
      %s33 = sphi 0, %s31
      %s34 = sphi 0, %s32
      %s35 = sphi 0, %s33
      %s36 = sphi 0, %s34
      %s48 = sphi 0, %s50
      %s51 = sphi 0, %s48
      %s52 = sphi 0, %s51
      %s68 = sphi 0, %s52
      %s84 = sphi 0, %s86
      %s87 = sphi 0, %s84
      %s88 = sphi 0, %s87
      %s104 = sphi 0, %s88
      %s120 = sphi 0, %s122
      %s123 = sphi 0, %s120
      %s124 = sphi 0, %s123
      %s140 = sphi 0, %s124
      %s144 = sphi 0, %s144
      %s146 = sphi 0, %s144
      %s147 = sphi 0, %s146
      %s161 = sphi 0, %s147
      %s165 = sphi 0, %s165
      %s167 = sphi 0, %s165
      %s168 = sphi 0, %s167
      %s182 = sphi 0, %s168
      %s186 = sphi 0, %s186
      %s188 = sphi 0, %s186
      %s189 = sphi 0, %s188
      %s203 = sphi 0, %s189
      %s207 = sphi 0, %s207
      %s209 = sphi 0, %s207
      %s210 = sphi 0, %s209
      %s224 = sphi 0, %s210
      %s232 = sphi 0, %s234
      %s235 = sphi 0, %s232
      %s236 = sphi 0, %s235
      %s252 = sphi 0, %s236
    $region4: #{tpu_custom_call.1} parent=1 // loop_header_branch
      %27 = sbr.rel (%p25) target = $region8
    $region5: #{tpu_custom_call.1} parent=1 // loop_body
      %s29 = ssub.s32 %s24, 1
      %s30 = ssub.s32 %s24, 2
      %s37 = sadd.s32 1, %s32
      %p38 = scmp.ge.s32.totalorder %s37, 1
      %s39 = scalar_select %p38, 0, %s37
      %s40 = sadd.s32 1, %s31
      %s41 = scalar_select %p38, %s40, %s31
      %p42 = scmp.ge.s32.totalorder %s41, 2
      %s43 = scalar_select %p42, 0, %s41
      %s44 = ssub.s32 %s31, %s43
      %s45 = ssub.s32 %s32, %s39
      %s46 = sor.u32 %s44, %s45
      %p47 = scmp.eq.s32.totalorder %s46, 0
      %s49 = sadd.s32 %s48, 1
      %s50 = scalar_select %p47, %s48, %s49
      %p53 = pneg %p47
      %p54 = scmp.eq.s32.totalorder %s24, 1
      %p55 = por %p53, %p54
      %p56 = scmp.ne.s32.totalorder %s48, %s51
      %p57 = scmp.eq.s32.totalorder %s24, 0
      %p58 = por %p56, %p57
      %p59 = scmp.ne.s32.totalorder %s48, %s51
      %p60 = scmp.eq.s32.totalorder %s29, 1
      %p61 = por %p59, %p60
      %p62 = scmp.ne.s32.totalorder %s51, %s52
      %p63 = scmp.eq.s32.totalorder %s29, 0
      %p64 = por %p62, %p63
      %p65 = scmp.ne.s32.totalorder %s51, %s52
      %p66 = scmp.eq.s32.totalorder %s30, 1
      %p67 = por %p65, %p66
      %p69 = scmp.ne.s32.totalorder %s52, %s68
      %p70 = scmp.eq.s32.totalorder %s30, 0
      %p71 = por %p69, %p70
      %s72 = smul.u32 %s32, 2
      %s73 = ssub.s32 %s72, 1
      %p74 = scmp.gt.s32.totalorder %s73, 0
      %s75 = scalar_select %p74, %s73, 0
      %s76 = smul.u32 %s39, 2
      %s77 = ssub.s32 %s76, 1
      %p78 = scmp.gt.s32.totalorder %s77, 0
      %s79 = scalar_select %p78, %s77, 0
      %s80 = ssub.s32 %s31, %s43
      %s81 = ssub.s32 %s75, %s79
      %s82 = sor.u32 %s80, %s81
      %p83 = scmp.eq.s32.totalorder %s82, 0
      %s85 = sadd.s32 %s84, 1
      %s86 = scalar_select %p83, %s84, %s85
      %p89 = pneg %p83
      %p90 = scmp.eq.s32.totalorder %s24, 1
      %p91 = por %p89, %p90
      %p92 = scmp.ne.s32.totalorder %s84, %s87
      %p93 = scmp.eq.s32.totalorder %s24, 0
      %p94 = por %p92, %p93
      %p95 = scmp.ne.s32.totalorder %s84, %s87
      %p96 = scmp.eq.s32.totalorder %s29, 1
      %p97 = por %p95, %p96
      %p98 = scmp.ne.s32.totalorder %s87, %s88
      %p99 = scmp.eq.s32.totalorder %s29, 0
      %p100 = por %p98, %p99
      %p101 = scmp.ne.s32.totalorder %s87, %s88
      %p102 = scmp.eq.s32.totalorder %s30, 1
      %p103 = por %p101, %p102
      %p105 = scmp.ne.s32.totalorder %s88, %s104
      %p106 = scmp.eq.s32.totalorder %s30, 0
      %p107 = por %p105, %p106
      %s108 = sadd.s32 %s32, 1
      %s109 = smul.u32 %s108, 2
      %p110 = scmp.lt.s32.totalorder %s109, 1
      %s111 = scalar_select %p110, %s109, 1
      %s112 = sadd.s32 %s39, 1
      %s113 = smul.u32 %s112, 2
      %p114 = scmp.lt.s32.totalorder %s113, 1
      %s115 = scalar_select %p114, %s113, 1
      %s116 = ssub.s32 %s31, %s43
      %s117 = ssub.s32 %s111, %s115
      %s118 = sor.u32 %s116, %s117
      %p119 = scmp.eq.s32.totalorder %s118, 0
      %s121 = sadd.s32 %s120, 1
      %s122 = scalar_select %p119, %s120, %s121
      %p125 = pneg %p119
      %p126 = scmp.eq.s32.totalorder %s24, 1
      %p127 = por %p125, %p126
      %p128 = scmp.ne.s32.totalorder %s120, %s123
      %p129 = scmp.eq.s32.totalorder %s24, 0
      %p130 = por %p128, %p129
      %p131 = scmp.ne.s32.totalorder %s120, %s123
      %p132 = scmp.eq.s32.totalorder %s29, 1
      %p133 = por %p131, %p132
      %p134 = scmp.ne.s32.totalorder %s123, %s124
      %p135 = scmp.eq.s32.totalorder %s29, 0
      %p136 = por %p134, %p135
      %p137 = scmp.ne.s32.totalorder %s123, %s124
      %p138 = scmp.eq.s32.totalorder %s30, 1
      %p139 = por %p137, %p138
      %p141 = scmp.ne.s32.totalorder %s124, %s140
      %p142 = scmp.eq.s32.totalorder %s30, 0
      %p143 = por %p141, %p142
      %s145 = sadd.s32 %s144, 1
      %p148 = scmp.eq.s32.totalorder %s24, 1
      %p149 = scmp.ne.s32.totalorder %s144, %s146
      %p150 = scmp.eq.s32.totalorder %s24, 0
      %p151 = por %p149, %p150
      %p152 = scmp.ne.s32.totalorder %s144, %s146
      %p153 = scmp.eq.s32.totalorder %s29, 1
      %p154 = por %p152, %p153
      %p155 = scmp.ne.s32.totalorder %s146, %s147
      %p156 = scmp.eq.s32.totalorder %s29, 0
      %p157 = por %p155, %p156
      %p158 = scmp.ne.s32.totalorder %s146, %s147
      %p159 = scmp.eq.s32.totalorder %s30, 1
      %p160 = por %p158, %p159
      %p162 = scmp.ne.s32.totalorder %s147, %s161
      %p163 = scmp.eq.s32.totalorder %s30, 0
      %p164 = por %p162, %p163
      %s166 = sadd.s32 %s165, 1
      %p169 = scmp.eq.s32.totalorder %s24, 1
      %p170 = scmp.ne.s32.totalorder %s165, %s167
      %p171 = scmp.eq.s32.totalorder %s24, 0
      %p172 = por %p170, %p171
      %p173 = scmp.ne.s32.totalorder %s165, %s167
      %p174 = scmp.eq.s32.totalorder %s29, 1
      %p175 = por %p173, %p174
      %p176 = scmp.ne.s32.totalorder %s167, %s168
      %p177 = scmp.eq.s32.totalorder %s29, 0
      %p178 = por %p176, %p177
      %p179 = scmp.ne.s32.totalorder %s167, %s168
      %p180 = scmp.eq.s32.totalorder %s30, 1
      %p181 = por %p179, %p180
      %p183 = scmp.ne.s32.totalorder %s168, %s182
      %p184 = scmp.eq.s32.totalorder %s30, 0
      %p185 = por %p183, %p184
      %s187 = sadd.s32 %s186, 1
      %p190 = scmp.eq.s32.totalorder %s24, 1
      %p191 = scmp.ne.s32.totalorder %s186, %s188
      %p192 = scmp.eq.s32.totalorder %s24, 0
      %p193 = por %p191, %p192
      %p194 = scmp.ne.s32.totalorder %s186, %s188
      %p195 = scmp.eq.s32.totalorder %s29, 1
      %p196 = por %p194, %p195
      %p197 = scmp.ne.s32.totalorder %s188, %s189
      %p198 = scmp.eq.s32.totalorder %s29, 0
      %p199 = por %p197, %p198
      %p200 = scmp.ne.s32.totalorder %s188, %s189
      %p201 = scmp.eq.s32.totalorder %s30, 1
      %p202 = por %p200, %p201
      %p204 = scmp.ne.s32.totalorder %s189, %s203
      %p205 = scmp.eq.s32.totalorder %s30, 0
      %p206 = por %p204, %p205
      %s208 = sadd.s32 %s207, 1
      %p211 = scmp.eq.s32.totalorder %s24, 1
      %p212 = scmp.ne.s32.totalorder %s207, %s209
      %p213 = scmp.eq.s32.totalorder %s24, 0
      %p214 = por %p212, %p213
      %p215 = scmp.ne.s32.totalorder %s207, %s209
      %p216 = scmp.eq.s32.totalorder %s29, 1
      %p217 = por %p215, %p216
      %p218 = scmp.ne.s32.totalorder %s209, %s210
      %p219 = scmp.eq.s32.totalorder %s29, 0
      %p220 = por %p218, %p219
      %p221 = scmp.ne.s32.totalorder %s209, %s210
      %p222 = scmp.eq.s32.totalorder %s30, 1
      %p223 = por %p221, %p222
      %p225 = scmp.ne.s32.totalorder %s210, %s224
      %p226 = scmp.eq.s32.totalorder %s30, 0
      %p227 = por %p225, %p226
      %s228 = ssub.s32 %s31, %s43
      %s229 = ssub.s32 %s32, %s39
      %s230 = sor.u32 %s228, %s229
      %p231 = scmp.eq.s32.totalorder %s230, 0
      %s233 = sadd.s32 %s232, 1
      %s234 = scalar_select %p231, %s232, %s233
      %p237 = pneg %p231
      %p238 = scmp.eq.s32.totalorder %s24, 1
      %p239 = por %p237, %p238
      %p240 = scmp.ne.s32.totalorder %s232, %s235
      %p241 = scmp.eq.s32.totalorder %s24, 0
      %p242 = por %p240, %p241
      %p243 = scmp.ne.s32.totalorder %s232, %s235
      %p244 = scmp.eq.s32.totalorder %s29, 1
      %p245 = por %p243, %p244
      %p246 = scmp.ne.s32.totalorder %s235, %s236
      %p247 = scmp.eq.s32.totalorder %s29, 0
      %p248 = por %p246, %p247
      %p249 = scmp.ne.s32.totalorder %s235, %s236
      %p250 = scmp.eq.s32.totalorder %s30, 1
      %p251 = por %p249, %p250
      %p253 = scmp.ne.s32.totalorder %s236, %s252
      %p254 = scmp.eq.s32.totalorder %s30, 0
      %p255 = por %p253, %p254
      %p256 = scmp.le.s32.totalorder 1, %s24
      %p257 = scmp.lt.s32.totalorder %s24, 3
      %p258 = pnand %p256, %p257
      %p259 = pneg %p258
      // Predicated region
      $region9: #{tpu_custom_call.1} parent=5 // pred_check
        _
      $region10: #{tpu_custom_call.1} parent=5 // pred_check_branch
        %261 = sbr.rel (%p258) target = $region12
      $region11: #{tpu_custom_call.1} parent=5 // pred_region
        %s262 = ssub.s32 %s24, 1
        // Predicated region
        $region13: #{tpu_custom_call.1} parent=11 // pred_check
          %p263 = pneg %p157
        $region14: #{tpu_custom_call.1} parent=11 // pred_check_branch
          %265 = sbr.rel (%p263) target = $region16
        $region15: #{tpu_custom_call.1} parent=11 // pred_region
          %267 = vsyncadd [#allocation9], 0
          %s268 = sshll.u32 %s3, 4
          %s269 = int_to_ptr.hbm [resolvable:$true] %s268
          %s270 = sshll.u32 [#allocation8], 4
          %s271 = int_to_ptr.vmem [resolvable:$true] %s270
          %276 = dma.hbm_to_vmem [thread:$0]  %s269, 18432, %s271, [#allocation9], 128, 128, 8
        $region16: #{tpu_custom_call.1} parent=11 // pred_fallthru
          _
        // Predicated region
        $region17: #{tpu_custom_call.1} parent=11 // pred_check
          %p277 = pneg %p178
        $region18: #{tpu_custom_call.1} parent=11 // pred_check_branch
          %279 = sbr.rel (%p277) target = $region20
        $region19: #{tpu_custom_call.1} parent=11 // pred_region
          _
        $region20: #{tpu_custom_call.1} parent=11 // pred_fallthru
          _
        // Predicated region
        $region21: #{tpu_custom_call.1} parent=11 // pred_check
          %p280 = pneg %p199
        $region22: #{tpu_custom_call.1} parent=11 // pred_check_branch
          %282 = sbr.rel (%p280) target = $region24
        $region23: #{tpu_custom_call.1} parent=11 // pred_region
          %284 = vsyncadd [#allocation9], 0
          %s285 = sshll.u32 %s5, 4
          %s286 = int_to_ptr.hbm [resolvable:$true] %s285
          %s287 = sshll.u32 [#allocation10], 4
          %s288 = int_to_ptr.vmem [resolvable:$true] %s287
          %293 = dma.hbm_to_vmem [thread:$0]  %s286, 18432, %s288, [#allocation9], 128, 128, 8
        $region24: #{tpu_custom_call.1} parent=11 // pred_fallthru
          _
        // Predicated region
        $region25: #{tpu_custom_call.1} parent=11 // pred_check
          %p294 = pneg %p220
        $region26: #{tpu_custom_call.1} parent=11 // pred_check_branch
          %296 = sbr.rel (%p294) target = $region28
        $region27: #{tpu_custom_call.1} parent=11 // pred_region
          %298 = vsyncadd [#allocation12], 0
          %s299 = sshll.u32 %s6, 4
          %s300 = int_to_ptr.hbm [resolvable:$true] %s299
          %s301 = sshll.u32 [#allocation11], 4
          %s302 = int_to_ptr.vmem [resolvable:$true] %s301
          %307 = dma.hbm_to_vmem [thread:$0]  %s300, 48, %s302, [#allocation12], 16, 16, 1
        $region28: #{tpu_custom_call.1} parent=11 // pred_fallthru
          _
      $region12: #{tpu_custom_call.1} parent=5 // pred_fallthru
        _
      %p308 = scmp.lt.s32.totalorder %s24, 2
      // Predicated region
      $region29: #{tpu_custom_call.1} parent=5 // pred_check
        %p309 = pneg %p308
      $region30: #{tpu_custom_call.1} parent=5 // pred_check_branch
        %311 = sbr.rel (%p309) target = $region32
      $region31: #{tpu_custom_call.1} parent=5 // pred_region
        // Predicated region
        $region33: #{tpu_custom_call.1} parent=31 // pred_check
          %p312 = pneg %p58
        $region34: #{tpu_custom_call.1} parent=31 // pred_check_branch
          %314 = sbr.rel (%p312) target = $region36
        $region35: #{tpu_custom_call.1} parent=31 // pred_region
          %s315 = sand.u32 %s48, 1
          %s316 = scalar_lea.sflag [#allocation3], %s315
          %s317 = sand.u32 %s48, 1
          %s318 = smul.addr %s317, 16
          %s319 = scalar_lea.vmem [#allocation2], %s318
          %s320 = smul.u32 2, %s32
          %322 = vsyncadd %s316, 0
          %s323 = smul.addr %s31, 2
          %s324 = sadd.s32 %s320, %s323
          %s325 = smul.addr %s324, 8
          %s326 = scalar_lea.hbm %s0, %s325
          %s327 = sshll.u32 %s326, 4
          %s328 = int_to_ptr.hbm [resolvable:$true] %s327
          %s329 = sshll.u32 %s319, 4
          %s330 = int_to_ptr.vmem [resolvable:$true] %s329
          %335 = dma.hbm_to_vmem [thread:$0]  %s328, 256, %s330, %s316, 128, 128, 8
        $region36: #{tpu_custom_call.1} parent=31 // pred_fallthru
          _
        // Predicated region
        $region37: #{tpu_custom_call.1} parent=31 // pred_check
          %p336 = pneg %p94
        $region38: #{tpu_custom_call.1} parent=31 // pred_check_branch
          %338 = sbr.rel (%p336) target = $region40
        $region39: #{tpu_custom_call.1} parent=31 // pred_region
          %s339 = sand.u32 %s24, 1
          %s340 = scalar_lea.sflag [#allocation6], %s339
          %s341 = sand.u32 %s84, 1
          %s342 = smul.addr %s341, 8
          %s343 = scalar_lea.vmem [#allocation5], %s342
          %s344 = smul.u32 %s32, 2
          %s345 = ssub.s32 %s344, 1
          %p346 = scmp.gt.s32.totalorder %s345, 0
          %s347 = scalar_select %p346, %s345, 0
          %349 = vsyncadd %s340, 0
          %s350 = smul.addr %s31, 2
          %s351 = sadd.s32 %s347, %s350
          %s352 = smul.addr %s351, 8
          %s353 = scalar_lea.hbm %s1, %s352
          %s355 = sshll.u32 %s353, 4
          %s356 = int_to_ptr.hbm [resolvable:$true] %s355
          %s357 = sshll.u32 %s343, 4
          %s358 = int_to_ptr.vmem [resolvable:$true] %s357
          %360 = dma.hbm_to_vmem [thread:$0]  %s356, 128, %s358, %s340
        $region40: #{tpu_custom_call.1} parent=31 // pred_fallthru
          _
        // Predicated region
        $region41: #{tpu_custom_call.1} parent=31 // pred_check
          %p361 = pneg %p130
        $region42: #{tpu_custom_call.1} parent=31 // pred_check_branch
          %363 = sbr.rel (%p361) target = $region44
        $region43: #{tpu_custom_call.1} parent=31 // pred_region
          %s364 = sand.u32 %s24, 1
          %s365 = scalar_lea.sflag [#allocation6], %s364
          %s366 = sand.u32 %s120, 1
          %s367 = smul.addr %s366, 8
          %s368 = scalar_lea.vmem [#allocation7], %s367
          %s369 = sadd.s32 %s32, 1
          %s370 = smul.u32 %s369, 2
          %p371 = scmp.lt.s32.totalorder %s370, 1
          %s372 = scalar_select %p371, %s370, 1
          %374 = vsyncadd %s365, 0
          %s375 = smul.addr %s31, 2
          %s376 = sadd.s32 %s372, %s375
          %s377 = smul.addr %s376, 8
          %s378 = scalar_lea.hbm %s2, %s377
          %s380 = sshll.u32 %s378, 4
          %s381 = int_to_ptr.hbm [resolvable:$true] %s380
          %s382 = sshll.u32 %s368, 4
          %s383 = int_to_ptr.vmem [resolvable:$true] %s382
          %385 = dma.hbm_to_vmem [thread:$0]  %s381, 128, %s383, %s365
        $region44: #{tpu_custom_call.1} parent=31 // pred_fallthru
          _
      $region32: #{tpu_custom_call.1} parent=5 // pred_fallthru
        _
      %p386 = scmp.le.s32.totalorder 1, %s24
      %p387 = scmp.lt.s32.totalorder %s24, 3
      %p388 = pnand %p386, %p387
      %p389 = pneg %p388
      // Predicated region
      $region45: #{tpu_custom_call.1} parent=5 // pred_check
        _
      $region46: #{tpu_custom_call.1} parent=5 // pred_check_branch
        %391 = sbr.rel (%p388) target = $region48
      $region47: #{tpu_custom_call.1} parent=5 // pred_region
        %s392 = ssub.s32 %s24, 1
        %s393 = sand.u32 %s51, 1
        %s394 = scalar_lea.sflag [#allocation3], %s393
        %s395 = sand.u32 %s51, 1
        %s396 = smul.addr %s395, 16
        %s397 = scalar_lea.vmem [#allocation2], %s396
        // Predicated region
        $region49: #{tpu_custom_call.1} parent=47 // pred_check
          %p398 = pneg %p64
        $region50: #{tpu_custom_call.1} parent=47 // pred_check_branch
          %400 = sbr.rel (%p398) target = $region52
        $region51: #{tpu_custom_call.1} parent=47 // pred_region
          %402 = dma.done %s394, 256
        $region52: #{tpu_custom_call.1} parent=47 // pred_fallthru
          _
        %s403 = sand.u32 %s29, 1
        %s404 = scalar_lea.sflag [#allocation6], %s403
        %s405 = sand.u32 %s87, 1
        %s406 = smul.addr %s405, 8
        %s407 = scalar_lea.vmem [#allocation5], %s406
        // Predicated region
        $region53: #{tpu_custom_call.1} parent=47 // pred_check
          %p408 = pneg %p100
        $region54: #{tpu_custom_call.1} parent=47 // pred_check_branch
          %410 = sbr.rel (%p408) target = $region56
        $region55: #{tpu_custom_call.1} parent=47 // pred_region
          %412 = dma.done %s404, 128
        $region56: #{tpu_custom_call.1} parent=47 // pred_fallthru
          _
        %s413 = sand.u32 %s29, 1
        %s414 = scalar_lea.sflag [#allocation6], %s413
        %s415 = sand.u32 %s123, 1
        %s416 = smul.addr %s415, 8
        %s417 = scalar_lea.vmem [#allocation7], %s416
        // Predicated region
        $region57: #{tpu_custom_call.1} parent=47 // pred_check
          %p418 = pneg %p136
        $region58: #{tpu_custom_call.1} parent=47 // pred_check_branch
          %420 = sbr.rel (%p418) target = $region60
        $region59: #{tpu_custom_call.1} parent=47 // pred_region
          %422 = dma.done %s414, 128
        $region60: #{tpu_custom_call.1} parent=47 // pred_fallthru
          _
        // Predicated region
        $region61: #{tpu_custom_call.1} parent=47 // pred_check
          %p423 = pneg %p157
        $region62: #{tpu_custom_call.1} parent=47 // pred_check_branch
          %425 = sbr.rel (%p423) target = $region64
        $region63: #{tpu_custom_call.1} parent=47 // pred_region
          %427 = dma.done [#allocation9], 18432
        $region64: #{tpu_custom_call.1} parent=47 // pred_fallthru
          _
        // Predicated region
        $region65: #{tpu_custom_call.1} parent=47 // pred_check
          %p428 = pneg %p199
        $region66: #{tpu_custom_call.1} parent=47 // pred_check_branch
          %430 = sbr.rel (%p428) target = $region68
        $region67: #{tpu_custom_call.1} parent=47 // pred_region
          %432 = dma.done [#allocation9], 18432
        $region68: #{tpu_custom_call.1} parent=47 // pred_fallthru
          _
        // Predicated region
        $region69: #{tpu_custom_call.1} parent=47 // pred_check
          %p433 = pneg %p220
        $region70: #{tpu_custom_call.1} parent=47 // pred_check_branch
          %435 = sbr.rel (%p433) target = $region72
        $region71: #{tpu_custom_call.1} parent=47 // pred_region
          %437 = dma.done [#allocation12], 48
        $region72: #{tpu_custom_call.1} parent=47 // pred_fallthru
          _
        %s438 = sand.u32 %s51, 1
        %s439 = scalar_lea.sflag [#allocation3], %s438
        %s440 = sand.u32 %s51, 1
        %s441 = smul.addr %s440, 16
        %s442 = scalar_lea.vmem [#allocation2], %s441
        %p443 = pneg %p64
        %p444 = pneg %p61
        %s445 = sand.u32 %s29, 1
        %s446 = scalar_lea.sflag [#allocation6], %s445
        %s447 = sand.u32 %s87, 1
        %s448 = smul.addr %s447, 8
        %s449 = scalar_lea.vmem [#allocation5], %s448
        %p450 = pneg %p100
        %p451 = pneg %p97
        %s452 = sand.u32 %s29, 1
        %s453 = scalar_lea.sflag [#allocation6], %s452
        %s454 = sand.u32 %s123, 1
        %s455 = smul.addr %s454, 8
        %s456 = scalar_lea.vmem [#allocation7], %s455
        %p457 = pneg %p136
        %p458 = pneg %p133
        %p459 = pneg %p157
        %p460 = pneg %p154
        %p461 = pneg %p178
        %p462 = pneg %p175
        %p463 = pneg %p199
        %p464 = pneg %p196
        %p465 = pneg %p220
        %p466 = pneg %p217
        %p467 = pneg %p248
        %p468 = pneg %p245
        %s469 = sand.u32 %s235, 1
        %s470 = scalar_lea.sflag [#allocation4], %s469
        %s471 = sand.u32 %s235, 1
        %s472 = smul.addr %s471, 16
        %s473 = scalar_lea.vmem [#allocation13], %s472
        %s474 = smul.u32 2, %s34
        %s475 = smul.u32 %s34, 2
        %s476 = ssub.s32 %s475, 1
        %p477 = scmp.gt.s32.totalorder %s476, 0
        %s478 = scalar_select %p477, %s476, 0
        %s479 = sadd.s32 %s34, 1
        %s480 = smul.u32 %s479, 2
        %p481 = scmp.lt.s32.totalorder %s480, 1
        %s482 = scalar_select %p481, %s480, 1
        %s483 = smul.u32 2, %s34
        %s484 = smul.u32 %s34, 16
        %s485 = ssub.s32 %s484, 8
        %v486 = vld [vmem:[%s407] sm:$0xff]
        %v487 = vld [vmem:[%s397] sm:$0xff]
        %v488 = vld [vmem:[%s397 + $0x8] sm:$0xff]
        %v489 = vld [vmem:[%s417] sm:$0xff]
        %v490 = vlaneseq
        %v491 = vshrl.u32 %v490, 7
        %v492 = vadd.s32 %v491, 8
        %v493 = vadd.s32 %v491, 16
        %v494 = vadd.s32 %v491, 24
        %v495 = vstv %s485
        %v496 = vadd.s32 %v495, %v491
        %v497 = vadd.s32 %v495, %v492
        %v498 = vadd.s32 %v495, %v493
        %v499 = vadd.s32 %v495, %v494
        %vm500 = vcmp.ge.s32.totalorder %v496, 0
        %vm501 = vcmp.ge.s32.totalorder %v497, 0
        %vm502 = vcmp.ge.s32.totalorder %v498, 0
        %vm503 = vcmp.ge.s32.totalorder %v499, 0
        %vm504 = vcmp.lt.s32.totalorder %v496, 16
        %vm505 = vcmp.lt.s32.totalorder %v497, 16
        %vm506 = vcmp.lt.s32.totalorder %v498, 16
        %vm507 = vcmp.lt.s32.totalorder %v499, 16
        %vm508 = vmand %vm500, %vm504
        %vm509 = vmand %vm501, %vm505
        %vm510 = vmand %vm502, %vm506
        %vm511 = vmand %vm503, %vm507
        %v512 = vmul.f32 %v486, 0.1
        %v513 = vmul.f32 %v487, 0.1
        %v514 = vmul.f32 %v488, 0.1
        %v515 = vmul.f32 %v489, 0.1
        %v516 = vmax.f32 %v486, %v512
        %v517 = vmax.f32 %v487, %v513
        %v518 = vmax.f32 %v488, %v514
        %v519 = vmax.f32 %v489, %v515
        %v520 = vsel %vm508, 1, 0
        %v521 = vsel %vm509, 1, 0
        %v522 = vsel %vm510, 1, 0
        %v523 = vsel %vm511, 1, 0
        %vm524 = vcmp.eq.s32.totalorder %v520, 1
        %vm525 = vcmp.eq.s32.totalorder %v521, 1
        %vm526 = vcmp.eq.s32.totalorder %v522, 1
        %vm527 = vcmp.eq.s32.totalorder %v523, 1
        %v528 = vsel %vm524, %v516, 0.0
        %v529 = vsel %vm525, %v517, 0.0
        %v530 = vsel %vm526, %v518, 0.0
        %v531 = vsel %vm527, %v519, 0.0
        %v532 = vld [vmem:[#allocation8] sm:$0xff]
        %v533 = vld [vmem:[#allocation8 + $0x8] sm:$0xff]
        %v534 = vld [vmem:[#allocation8 + $0x10] sm:$0xff]
        %v535 = vld [vmem:[#allocation8 + $0x18] sm:$0xff]
        %v536 = vld [vmem:[#allocation8 + $0x20] sm:$0xff]
        %v537 = vld [vmem:[#allocation8 + $0x28] sm:$0xff]
        %v538 = vld [vmem:[#allocation8 + $0x30] sm:$0xff]
        %v539 = vld [vmem:[#allocation8 + $0x38] sm:$0xff]
        %v540 = vld [vmem:[#allocation8 + $0x40] sm:$0xff]
        %v541 = vld [vmem:[#allocation8 + $0x48] sm:$0xff]
        %v542 = vld [vmem:[#allocation8 + $0x50] sm:$0xff]
        %v543 = vld [vmem:[#allocation8 + $0x58] sm:$0xff]
        %v544 = vld [vmem:[#allocation8 + $0x60] sm:$0xff]
        %v545 = vld [vmem:[#allocation8 + $0x68] sm:$0xff]
        %v546 = vld [vmem:[#allocation8 + $0x70] sm:$0xff]
        %v547 = vld [vmem:[#allocation8 + $0x78] sm:$0xff]
        %v548 = vld [vmem:[#allocation8 + $0x80] sm:$0xff]
        %v549 = vld [vmem:[#allocation8 + $0x88] sm:$0xff]
        %v550 = vld [vmem:[#allocation8 + $0x90] sm:$0xff]
        %v551 = vld [vmem:[#allocation8 + $0x98] sm:$0xff]
        %v552 = vld [vmem:[#allocation8 + $0xa0] sm:$0xff]
        %v553 = vld [vmem:[#allocation8 + $0xa8] sm:$0xff]
        %v554 = vld [vmem:[#allocation8 + $0xb0] sm:$0xff]
        %v555 = vld [vmem:[#allocation8 + $0xb8] sm:$0xff]
        %v556 = vld [vmem:[#allocation8 + $0xc0] sm:$0xff]
        %v557 = vld [vmem:[#allocation8 + $0xc8] sm:$0xff]
        %v558 = vld [vmem:[#allocation8 + $0xd0] sm:$0xff]
        %v559 = vld [vmem:[#allocation8 + $0xd8] sm:$0xff]
        %v560 = vld [vmem:[#allocation8 + $0xe0] sm:$0xff]
        %v561 = vld [vmem:[#allocation8 + $0xe8] sm:$0xff]
        %v562 = vld [vmem:[#allocation8 + $0xf0] sm:$0xff]
        %v563 = vld [vmem:[#allocation8 + $0xf8] sm:$0xff]
        %v564 = vld [vmem:[#allocation8 + $0x100] sm:$0xff]
        %v565 = vld [vmem:[#allocation8 + $0x108] sm:$0xff]
        %v566 = vld [vmem:[#allocation8 + $0x110] sm:$0xff]
        %v567 = vld [vmem:[#allocation8 + $0x118] sm:$0xff]
        %v568 = vld [vmem:[#allocation8 + $0x120] sm:$0xff]
        %v569 = vld [vmem:[#allocation8 + $0x128] sm:$0xff]
        %v570 = vld [vmem:[#allocation8 + $0x130] sm:$0xff]
        %v571 = vld [vmem:[#allocation8 + $0x138] sm:$0xff]
        %v572 = vld [vmem:[#allocation8 + $0x140] sm:$0xff]
        %v573 = vld [vmem:[#allocation8 + $0x148] sm:$0xff]
        %v574 = vld [vmem:[#allocation8 + $0x150] sm:$0xff]
        %v575 = vld [vmem:[#allocation8 + $0x158] sm:$0xff]
        %v576 = vld [vmem:[#allocation8 + $0x160] sm:$0xff]
        %v577 = vld [vmem:[#allocation8 + $0x168] sm:$0xff]
        %v578 = vld [vmem:[#allocation8 + $0x170] sm:$0xff]
        %v579 = vld [vmem:[#allocation8 + $0x178] sm:$0xff]
        %v580 = vld [vmem:[%s4] sm:$0x1]
        %vm585 = vcmask 1046528
        %v586 = vrot.slane %v528, 1
        %v587 = vrot.slane %v529, 1
        %v588 = vsel %vm585, %v586, %v587
        %v589 = vrot.slane %v530, 1
        %v590 = vsel %vm585, %v587, %v589
        %v591 = vrot.slane %v531, 1
        %v592 = vsel %vm585, %v589, %v591
        %vm597 = vcmask 1045504
        %v598 = vrot.slane %v528, 2
        %v599 = vrot.slane %v529, 2
        %v600 = vsel %vm597, %v598, %v599
        %v601 = vrot.slane %v530, 2
        %v602 = vsel %vm597, %v599, %v601
        %v603 = vrot.slane %v531, 2
        %v604 = vsel %vm597, %v601, %v603
        %v610 = vperm.slane %v580, 0
        %612 = vmatpush.msra.mxu0 %v547
        %613 = vmatpush.msra.mxu0 %v546
        %614 = vmatpush.msra.mxu0 %v545
        %615 = vmatpush.msra.mxu0 %v544
        %616 = vmatpush.msra.mxu0 %v543
        %617 = vmatpush.msra.mxu0 %v542
        %618 = vmatpush.msra.mxu0 %v541
        %619 = vmatpush.msra.mxu0 %v540
        %620 = vmatpush.msra.mxu0 %v539
        %621 = vmatpush.msra.mxu0 %v538
        %622 = vmatpush.msra.mxu0 %v537
        %623 = vmatpush.msra.mxu0 %v536
        %624 = vmatpush.msra.mxu0 %v535
        %625 = vmatpush.msra.mxu0 %v534
        %626 = vmatpush.msra.mxu0 %v533
        %627 = vmatpush.msra.mxu0 %v532
        %628 = vmatmul.f32.gmra.mxu0 %v528
        %v629 = vpop.f32.mrf.mxu0
        %v630 = vadd.f32 %v610, %v629
        %631 = vmatmul.f32.gmra.mxu0 %v529
        %v632 = vpop.f32.mrf.mxu0
        %v633 = vadd.f32 %v610, %v632
        %634 = vmatmul.f32.gmra.mxu0 %v530
        %v635 = vpop.f32.mrf.mxu0
        %v636 = vadd.f32 %v610, %v635
        %637 = vmatmul.f32.gmra.mxu0 %v531
        %v638 = vpop.f32.mrf.mxu0
        %v639 = vadd.f32 %v610, %v638
        %640 = vdwg.mxu0
        %641 = vmatpush.msra.mxu0 %v563
        %642 = vmatpush.msra.mxu0 %v562
        %643 = vmatpush.msra.mxu0 %v561
        %644 = vmatpush.msra.mxu0 %v560
        %645 = vmatpush.msra.mxu0 %v559
        %646 = vmatpush.msra.mxu0 %v558
        %647 = vmatpush.msra.mxu0 %v557
        %648 = vmatpush.msra.mxu0 %v556
        %649 = vmatpush.msra.mxu0 %v555
        %650 = vmatpush.msra.mxu0 %v554
        %651 = vmatpush.msra.mxu0 %v553
        %652 = vmatpush.msra.mxu0 %v552
        %653 = vmatpush.msra.mxu0 %v551
        %654 = vmatpush.msra.mxu0 %v550
        %655 = vmatpush.msra.mxu0 %v549
        %656 = vmatpush.msra.mxu0 %v548
        %657 = vmatmul.f32.gmra.mxu0 %v588
        %v658 = vpop.f32.mrf.mxu0
        %v659 = vadd.f32 %v630, %v658
        %660 = vmatmul.f32.gmra.mxu0 %v590
        %v661 = vpop.f32.mrf.mxu0
        %v662 = vadd.f32 %v633, %v661
        %663 = vmatmul.f32.gmra.mxu0 %v592
        %v664 = vpop.f32.mrf.mxu0
        %v665 = vadd.f32 %v636, %v664
        %666 = vmatmul.f32.gmra.mxu0 %v591
        %v667 = vpop.f32.mrf.mxu0
        %v668 = vadd.f32 %v639, %v667
        %669 = vdwg.mxu0
        %670 = vmatpush.msra.mxu0 %v579
        %671 = vmatpush.msra.mxu0 %v578
        %672 = vmatpush.msra.mxu0 %v577
        %673 = vmatpush.msra.mxu0 %v576
        %674 = vmatpush.msra.mxu0 %v575
        %675 = vmatpush.msra.mxu0 %v574
        %676 = vmatpush.msra.mxu0 %v573
        %677 = vmatpush.msra.mxu0 %v572
        %678 = vmatpush.msra.mxu0 %v571
        %679 = vmatpush.msra.mxu0 %v570
        %680 = vmatpush.msra.mxu0 %v569
        %681 = vmatpush.msra.mxu0 %v568
        %682 = vmatpush.msra.mxu0 %v567
        %683 = vmatpush.msra.mxu0 %v566
        %684 = vmatpush.msra.mxu0 %v565
        %685 = vmatpush.msra.mxu0 %v564
        %686 = vmatmul.f32.gmra.mxu0 %v600
        %v687 = vpop.f32.mrf.mxu0
        %v688 = vadd.f32 %v659, %v687
        %689 = vmatmul.f32.gmra.mxu0 %v602
        %v690 = vpop.f32.mrf.mxu0
        %v691 = vadd.f32 %v662, %v690
        %692 = vmatmul.f32.gmra.mxu0 %v604
        %v693 = vpop.f32.mrf.mxu0
        %v694 = vadd.f32 %v665, %v693
        %695 = vmatmul.f32.gmra.mxu0 %v603
        %v696 = vpop.f32.mrf.mxu0
        %v697 = vadd.f32 %v668, %v696
        %698 = vdwg.mxu0
        %v699 = vmul.f32 %v688, 0.1
        %v700 = vmul.f32 %v691, 0.1
        %v701 = vmul.f32 %v694, 0.1
        %v702 = vmul.f32 %v697, 0.1
        %v703 = vmax.f32 %v688, %v699
        %v704 = vmax.f32 %v691, %v700
        %v705 = vmax.f32 %v694, %v701
        %v706 = vmax.f32 %v697, %v702
        %vm711 = vcmask 1040384
        %v712 = vrot.slane %v703, 7
        %v713 = vrot.slane %v704, 7
        %v714 = vsel %vm711, %v712, %v713
        %v715 = vrot.slane %v705, 7
        %v716 = vsel %vm711, %v713, %v715
        %v717 = vrot.slane %v706, 7
        %v718 = vsel %vm711, %v715, %v717
        %v723 = vsel %vm524, %v712, 0.0
        %v724 = vsel %vm525, %v714, 0.0
        %v725 = vsel %vm526, %v716, 0.0
        %v726 = vsel %vm527, %v718, 0.0
        %v727 = vld [vmem:[#allocation10] sm:$0xff]
        %v728 = vld [vmem:[#allocation10 + $0x8] sm:$0xff]
        %v729 = vld [vmem:[#allocation10 + $0x10] sm:$0xff]
        %v730 = vld [vmem:[#allocation10 + $0x18] sm:$0xff]
        %v731 = vld [vmem:[#allocation10 + $0x20] sm:$0xff]
        %v732 = vld [vmem:[#allocation10 + $0x28] sm:$0xff]
        %v733 = vld [vmem:[#allocation10 + $0x30] sm:$0xff]
        %v734 = vld [vmem:[#allocation10 + $0x38] sm:$0xff]
        %v735 = vld [vmem:[#allocation10 + $0x40] sm:$0xff]
        %v736 = vld [vmem:[#allocation10 + $0x48] sm:$0xff]
        %v737 = vld [vmem:[#allocation10 + $0x50] sm:$0xff]
        %v738 = vld [vmem:[#allocation10 + $0x58] sm:$0xff]
        %v739 = vld [vmem:[#allocation10 + $0x60] sm:$0xff]
        %v740 = vld [vmem:[#allocation10 + $0x68] sm:$0xff]
        %v741 = vld [vmem:[#allocation10 + $0x70] sm:$0xff]
        %v742 = vld [vmem:[#allocation10 + $0x78] sm:$0xff]
        %v743 = vld [vmem:[#allocation10 + $0x80] sm:$0xff]
        %v744 = vld [vmem:[#allocation10 + $0x88] sm:$0xff]
        %v745 = vld [vmem:[#allocation10 + $0x90] sm:$0xff]
        %v746 = vld [vmem:[#allocation10 + $0x98] sm:$0xff]
        %v747 = vld [vmem:[#allocation10 + $0xa0] sm:$0xff]
        %v748 = vld [vmem:[#allocation10 + $0xa8] sm:$0xff]
        %v749 = vld [vmem:[#allocation10 + $0xb0] sm:$0xff]
        %v750 = vld [vmem:[#allocation10 + $0xb8] sm:$0xff]
        %v751 = vld [vmem:[#allocation10 + $0xc0] sm:$0xff]
        %v752 = vld [vmem:[#allocation10 + $0xc8] sm:$0xff]
        %v753 = vld [vmem:[#allocation10 + $0xd0] sm:$0xff]
        %v754 = vld [vmem:[#allocation10 + $0xd8] sm:$0xff]
        %v755 = vld [vmem:[#allocation10 + $0xe0] sm:$0xff]
        %v756 = vld [vmem:[#allocation10 + $0xe8] sm:$0xff]
        %v757 = vld [vmem:[#allocation10 + $0xf0] sm:$0xff]
        %v758 = vld [vmem:[#allocation10 + $0xf8] sm:$0xff]
        %v759 = vld [vmem:[#allocation10 + $0x100] sm:$0xff]
        %v760 = vld [vmem:[#allocation10 + $0x108] sm:$0xff]
        %v761 = vld [vmem:[#allocation10 + $0x110] sm:$0xff]
        %v762 = vld [vmem:[#allocation10 + $0x118] sm:$0xff]
        %v763 = vld [vmem:[#allocation10 + $0x120] sm:$0xff]
        %v764 = vld [vmem:[#allocation10 + $0x128] sm:$0xff]
        %v765 = vld [vmem:[#allocation10 + $0x130] sm:$0xff]
        %v766 = vld [vmem:[#allocation10 + $0x138] sm:$0xff]
        %v767 = vld [vmem:[#allocation10 + $0x140] sm:$0xff]
        %v768 = vld [vmem:[#allocation10 + $0x148] sm:$0xff]
        %v769 = vld [vmem:[#allocation10 + $0x150] sm:$0xff]
        %v770 = vld [vmem:[#allocation10 + $0x158] sm:$0xff]
        %v771 = vld [vmem:[#allocation10 + $0x160] sm:$0xff]
        %v772 = vld [vmem:[#allocation10 + $0x168] sm:$0xff]
        %v773 = vld [vmem:[#allocation10 + $0x170] sm:$0xff]
        %v774 = vld [vmem:[#allocation10 + $0x178] sm:$0xff]
        %v775 = vld [vmem:[#allocation11] sm:$0x1]
        %v780 = vrot.slane %v723, 1
        %v781 = vrot.slane %v724, 1
        %v782 = vsel %vm585, %v780, %v781
        %v783 = vrot.slane %v725, 1
        %v784 = vsel %vm585, %v781, %v783
        %v785 = vrot.slane %v726, 1
        %v786 = vsel %vm585, %v783, %v785
        %v787 = vrot.slane %v723, 2
        %v788 = vrot.slane %v724, 2
        %v789 = vsel %vm597, %v787, %v788
        %v790 = vrot.slane %v725, 2
        %v791 = vsel %vm597, %v788, %v790
        %v792 = vrot.slane %v726, 2
        %v793 = vsel %vm597, %v790, %v792
        %v795 = vperm.slane %v775, 0
        %v797 = vrot.slane %v782, 1
        %v798 = vrot.slane %v784, 1
        %v799 = vsel %vm585, %v797, %v798
        %v800 = vrot.slane %v789, 1
        %v801 = vrot.slane %v791, 1
        %v802 = vsel %vm585, %v800, %v801
        %v803 = vrot.slane %v786, 1
        %v804 = vsel %vm585, %v798, %v803
        %v805 = vrot.slane %v793, 1
        %v806 = vsel %vm585, %v801, %v805
        %v807 = vrot.slane %v785, 1
        %v808 = vsel %vm585, %v803, %v807
        %v809 = vrot.slane %v792, 1
        %v810 = vsel %vm585, %v805, %v809
        %823 = vmatpush.msra.mxu0 %v742
        %824 = vmatpush.msra.mxu0 %v741
        %825 = vmatpush.msra.mxu0 %v740
        %826 = vmatpush.msra.mxu0 %v739
        %827 = vmatpush.msra.mxu0 %v738
        %828 = vmatpush.msra.mxu0 %v737
        %829 = vmatpush.msra.mxu0 %v736
        %830 = vmatpush.msra.mxu0 %v735
        %831 = vmatpush.msra.mxu0 %v734
        %832 = vmatpush.msra.mxu0 %v733
        %833 = vmatpush.msra.mxu0 %v732
        %834 = vmatpush.msra.mxu0 %v731
        %835 = vmatpush.msra.mxu0 %v730
        %836 = vmatpush.msra.mxu0 %v729
        %837 = vmatpush.msra.mxu0 %v728
        %838 = vmatpush.msra.mxu0 %v727
        %839 = vmatmul.f32.gmra.mxu0 %v782
        %v840 = vpop.f32.mrf.mxu0
        %v841 = vadd.f32 %v795, %v840
        %842 = vmatmul.f32.gmra.mxu0 %v784
        %v843 = vpop.f32.mrf.mxu0
        %v844 = vadd.f32 %v795, %v843
        %845 = vmatmul.f32.gmra.mxu0 %v786
        %v846 = vpop.f32.mrf.mxu0
        %v847 = vadd.f32 %v795, %v846
        %848 = vmatmul.f32.gmra.mxu0 %v785
        %v849 = vpop.f32.mrf.mxu0
        %v850 = vadd.f32 %v795, %v849
        %851 = vdwg.mxu0
        %852 = vmatpush.msra.mxu0 %v758
        %853 = vmatpush.msra.mxu0 %v757
        %854 = vmatpush.msra.mxu0 %v756
        %855 = vmatpush.msra.mxu0 %v755
        %856 = vmatpush.msra.mxu0 %v754
        %857 = vmatpush.msra.mxu0 %v753
        %858 = vmatpush.msra.mxu0 %v752
        %859 = vmatpush.msra.mxu0 %v751
        %860 = vmatpush.msra.mxu0 %v750
        %861 = vmatpush.msra.mxu0 %v749
        %862 = vmatpush.msra.mxu0 %v748
        %863 = vmatpush.msra.mxu0 %v747
        %864 = vmatpush.msra.mxu0 %v746
        %865 = vmatpush.msra.mxu0 %v745
        %866 = vmatpush.msra.mxu0 %v744
        %867 = vmatpush.msra.mxu0 %v743
        %868 = vmatmul.f32.gmra.mxu0 %v799
        %v869 = vpop.f32.mrf.mxu0
        %v870 = vadd.f32 %v841, %v869
        %871 = vmatmul.f32.gmra.mxu0 %v804
        %v872 = vpop.f32.mrf.mxu0
        %v873 = vadd.f32 %v844, %v872
        %874 = vmatmul.f32.gmra.mxu0 %v808
        %v875 = vpop.f32.mrf.mxu0
        %v876 = vadd.f32 %v847, %v875
        %877 = vmatmul.f32.gmra.mxu0 %v807
        %v878 = vpop.f32.mrf.mxu0
        %v879 = vadd.f32 %v850, %v878
        %880 = vdwg.mxu0
        %881 = vmatpush.msra.mxu0 %v774
        %882 = vmatpush.msra.mxu0 %v773
        %883 = vmatpush.msra.mxu0 %v772
        %884 = vmatpush.msra.mxu0 %v771
        %885 = vmatpush.msra.mxu0 %v770
        %886 = vmatpush.msra.mxu0 %v769
        %887 = vmatpush.msra.mxu0 %v768
        %888 = vmatpush.msra.mxu0 %v767
        %889 = vmatpush.msra.mxu0 %v766
        %890 = vmatpush.msra.mxu0 %v765
        %891 = vmatpush.msra.mxu0 %v764
        %892 = vmatpush.msra.mxu0 %v763
        %893 = vmatpush.msra.mxu0 %v762
        %894 = vmatpush.msra.mxu0 %v761
        %895 = vmatpush.msra.mxu0 %v760
        %896 = vmatpush.msra.mxu0 %v759
        %897 = vmatmul.f32.gmra.mxu0 %v802
        %v898 = vpop.f32.mrf.mxu0
        %v899 = vadd.f32 %v870, %v898
        %900 = vmatmul.f32.gmra.mxu0 %v806
        %v901 = vpop.f32.mrf.mxu0
        %v902 = vadd.f32 %v873, %v901
        %903 = vmatmul.f32.gmra.mxu0 %v810
        %v904 = vpop.f32.mrf.mxu0
        %v905 = vadd.f32 %v876, %v904
        %906 = vmatmul.f32.gmra.mxu0 %v809
        %v907 = vpop.f32.mrf.mxu0
        %v908 = vadd.f32 %v879, %v907
        %909 = vdwg.mxu0
        %v914 = vrot.slane %v486, 2
        %v915 = vrot.slane %v487, 2
        %v916 = vsel %vm597, %v914, %v915
        %v917 = vrot.slane %v488, 2
        %v918 = vsel %vm597, %v915, %v917
        %v919 = vrot.slane %v489, 2
        %v920 = vsel %vm597, %v917, %v919
        %v925 = vadd.f32 %v899, %v916
        %v926 = vadd.f32 %v902, %v918
        %v927 = vadd.f32 %v905, %v920
        %v928 = vadd.f32 %v908, %v919
        %v929 = vmul.f32 %v925, 0.1
        %v930 = vmul.f32 %v926, 0.1
        %v931 = vmul.f32 %v927, 0.1
        %v932 = vmul.f32 %v928, 0.1
        %v933 = vmax.f32 %v925, %v929
        %v934 = vmax.f32 %v926, %v930
        %v935 = vmax.f32 %v927, %v931
        %v936 = vmax.f32 %v928, %v932
        %vm941 = vcmask 1041408
        %v942 = vrot.slane %v933, 6
        %v943 = vrot.slane %v934, 6
        %v944 = vsel %vm941, %v942, %v943
        %v945 = vrot.slane %v935, 6
        %v946 = vsel %vm941, %v943, %v945
        %v947 = vrot.slane %v936, 6
        %v948 = vsel %vm941, %v945, %v947
        %v953 = vsel %vm524, %v942, 0.0
        %v954 = vsel %vm525, %v944, 0.0
        %v955 = vsel %vm526, %v946, 0.0
        %v956 = vsel %vm527, %v948, 0.0
        %s957 = scalar_lea.vmem [#allocation8], 384
        %v958 = vld [vmem:[%s957] sm:$0xff]
        %v959 = vld [vmem:[%s957 + $0x8] sm:$0xff]
        %v960 = vld [vmem:[%s957 + $0x10] sm:$0xff]
        %v961 = vld [vmem:[%s957 + $0x18] sm:$0xff]
        %v962 = vld [vmem:[%s957 + $0x20] sm:$0xff]
        %v963 = vld [vmem:[%s957 + $0x28] sm:$0xff]
        %v964 = vld [vmem:[%s957 + $0x30] sm:$0xff]
        %v965 = vld [vmem:[%s957 + $0x38] sm:$0xff]
        %v966 = vld [vmem:[%s957 + $0x40] sm:$0xff]
        %v967 = vld [vmem:[%s957 + $0x48] sm:$0xff]
        %v968 = vld [vmem:[%s957 + $0x50] sm:$0xff]
        %v969 = vld [vmem:[%s957 + $0x58] sm:$0xff]
        %v970 = vld [vmem:[%s957 + $0x60] sm:$0xff]
        %v971 = vld [vmem:[%s957 + $0x68] sm:$0xff]
        %v972 = vld [vmem:[%s957 + $0x70] sm:$0xff]
        %v973 = vld [vmem:[%s957 + $0x78] sm:$0xff]
        %v974 = vld [vmem:[%s957 + $0x80] sm:$0xff]
        %v975 = vld [vmem:[%s957 + $0x88] sm:$0xff]
        %v976 = vld [vmem:[%s957 + $0x90] sm:$0xff]
        %v977 = vld [vmem:[%s957 + $0x98] sm:$0xff]
        %v978 = vld [vmem:[%s957 + $0xa0] sm:$0xff]
        %v979 = vld [vmem:[%s957 + $0xa8] sm:$0xff]
        %v980 = vld [vmem:[%s957 + $0xb0] sm:$0xff]
        %v981 = vld [vmem:[%s957 + $0xb8] sm:$0xff]
        %v982 = vld [vmem:[%s957 + $0xc0] sm:$0xff]
        %v983 = vld [vmem:[%s957 + $0xc8] sm:$0xff]
        %v984 = vld [vmem:[%s957 + $0xd0] sm:$0xff]
        %v985 = vld [vmem:[%s957 + $0xd8] sm:$0xff]
        %v986 = vld [vmem:[%s957 + $0xe0] sm:$0xff]
        %v987 = vld [vmem:[%s957 + $0xe8] sm:$0xff]
        %v988 = vld [vmem:[%s957 + $0xf0] sm:$0xff]
        %v989 = vld [vmem:[%s957 + $0xf8] sm:$0xff]
        %v990 = vld [vmem:[%s957 + $0x100] sm:$0xff]
        %v991 = vld [vmem:[%s957 + $0x108] sm:$0xff]
        %v992 = vld [vmem:[%s957 + $0x110] sm:$0xff]
        %v993 = vld [vmem:[%s957 + $0x118] sm:$0xff]
        %v994 = vld [vmem:[%s957 + $0x120] sm:$0xff]
        %v995 = vld [vmem:[%s957 + $0x128] sm:$0xff]
        %v996 = vld [vmem:[%s957 + $0x130] sm:$0xff]
        %v997 = vld [vmem:[%s957 + $0x138] sm:$0xff]
        %v998 = vld [vmem:[%s957 + $0x140] sm:$0xff]
        %v999 = vld [vmem:[%s957 + $0x148] sm:$0xff]
        %v1000 = vld [vmem:[%s957 + $0x150] sm:$0xff]
        %v1001 = vld [vmem:[%s957 + $0x158] sm:$0xff]
        %v1002 = vld [vmem:[%s957 + $0x160] sm:$0xff]
        %v1003 = vld [vmem:[%s957 + $0x168] sm:$0xff]
        %v1004 = vld [vmem:[%s957 + $0x170] sm:$0xff]
        %v1005 = vld [vmem:[%s957 + $0x178] sm:$0xff]
        %s1006 = scalar_lea.vmem %s4, 1
        %v1007 = vld [vmem:[%s1006] sm:$0x1]
        %v1012 = vrot.slane %v953, 1
        %v1013 = vrot.slane %v954, 1
        %v1014 = vsel %vm585, %v1012, %v1013
        %v1015 = vrot.slane %v955, 1
        %v1016 = vsel %vm585, %v1013, %v1015
        %v1017 = vrot.slane %v956, 1
        %v1018 = vsel %vm585, %v1015, %v1017
        %v1019 = vrot.slane %v953, 2
        %v1020 = vrot.slane %v954, 2
        %v1021 = vsel %vm597, %v1019, %v1020
        %v1022 = vrot.slane %v955, 2
        %v1023 = vsel %vm597, %v1020, %v1022
        %v1024 = vrot.slane %v956, 2
        %v1025 = vsel %vm597, %v1022, %v1024
        %v1027 = vperm.slane %v1007, 0
        %v1029 = vrot.slane %v1014, 2
        %v1030 = vrot.slane %v1016, 2
        %v1031 = vsel %vm597, %v1029, %v1030
        %v1032 = vrot.slane %v1021, 2
        %v1033 = vrot.slane %v1023, 2
        %v1034 = vsel %vm597, %v1032, %v1033
        %v1035 = vrot.slane %v1018, 2
        %v1036 = vsel %vm597, %v1030, %v1035
        %v1037 = vrot.slane %v1025, 2
        %v1038 = vsel %vm597, %v1033, %v1037
        %v1039 = vrot.slane %v1017, 2
        %v1040 = vsel %vm597, %v1035, %v1039
        %v1041 = vrot.slane %v1024, 2
        %v1042 = vsel %vm597, %v1037, %v1041
        %1055 = vmatpush.msra.mxu0 %v973
        %1056 = vmatpush.msra.mxu0 %v972
        %1057 = vmatpush.msra.mxu0 %v971
        %1058 = vmatpush.msra.mxu0 %v970
        %1059 = vmatpush.msra.mxu0 %v969
        %1060 = vmatpush.msra.mxu0 %v968
        %1061 = vmatpush.msra.mxu0 %v967
        %1062 = vmatpush.msra.mxu0 %v966
        %1063 = vmatpush.msra.mxu0 %v965
        %1064 = vmatpush.msra.mxu0 %v964
        %1065 = vmatpush.msra.mxu0 %v963
        %1066 = vmatpush.msra.mxu0 %v962
        %1067 = vmatpush.msra.mxu0 %v961
        %1068 = vmatpush.msra.mxu0 %v960
        %1069 = vmatpush.msra.mxu0 %v959
        %1070 = vmatpush.msra.mxu0 %v958
        %1071 = vmatmul.f32.gmra.mxu0 %v1021
        %v1072 = vpop.f32.mrf.mxu0
        %v1073 = vadd.f32 %v1027, %v1072
        %1074 = vmatmul.f32.gmra.mxu0 %v1023
        %v1075 = vpop.f32.mrf.mxu0
        %v1076 = vadd.f32 %v1027, %v1075
        %1077 = vmatmul.f32.gmra.mxu0 %v1025
        %v1078 = vpop.f32.mrf.mxu0
        %v1079 = vadd.f32 %v1027, %v1078
        %1080 = vmatmul.f32.gmra.mxu0 %v1024
        %v1081 = vpop.f32.mrf.mxu0
        %v1082 = vadd.f32 %v1027, %v1081
        %1083 = vdwg.mxu0
        %1084 = vmatpush.msra.mxu0 %v989
        %1085 = vmatpush.msra.mxu0 %v988
        %1086 = vmatpush.msra.mxu0 %v987
        %1087 = vmatpush.msra.mxu0 %v986
        %1088 = vmatpush.msra.mxu0 %v985
        %1089 = vmatpush.msra.mxu0 %v984
        %1090 = vmatpush.msra.mxu0 %v983
        %1091 = vmatpush.msra.mxu0 %v982
        %1092 = vmatpush.msra.mxu0 %v981
        %1093 = vmatpush.msra.mxu0 %v980
        %1094 = vmatpush.msra.mxu0 %v979
        %1095 = vmatpush.msra.mxu0 %v978
        %1096 = vmatpush.msra.mxu0 %v977
        %1097 = vmatpush.msra.mxu0 %v976
        %1098 = vmatpush.msra.mxu0 %v975
        %1099 = vmatpush.msra.mxu0 %v974
        %1100 = vmatmul.f32.gmra.mxu0 %v1031
        %v1101 = vpop.f32.mrf.mxu0
        %v1102 = vadd.f32 %v1073, %v1101
        %1103 = vmatmul.f32.gmra.mxu0 %v1036
        %v1104 = vpop.f32.mrf.mxu0
        %v1105 = vadd.f32 %v1076, %v1104
        %1106 = vmatmul.f32.gmra.mxu0 %v1040
        %v1107 = vpop.f32.mrf.mxu0
        %v1108 = vadd.f32 %v1079, %v1107
        %1109 = vmatmul.f32.gmra.mxu0 %v1039
        %v1110 = vpop.f32.mrf.mxu0
        %v1111 = vadd.f32 %v1082, %v1110
        %1112 = vdwg.mxu0
        %1113 = vmatpush.msra.mxu0 %v1005
        %1114 = vmatpush.msra.mxu0 %v1004
        %1115 = vmatpush.msra.mxu0 %v1003
        %1116 = vmatpush.msra.mxu0 %v1002
        %1117 = vmatpush.msra.mxu0 %v1001
        %1118 = vmatpush.msra.mxu0 %v1000
        %1119 = vmatpush.msra.mxu0 %v999
        %1120 = vmatpush.msra.mxu0 %v998
        %1121 = vmatpush.msra.mxu0 %v997
        %1122 = vmatpush.msra.mxu0 %v996
        %1123 = vmatpush.msra.mxu0 %v995
        %1124 = vmatpush.msra.mxu0 %v994
        %1125 = vmatpush.msra.mxu0 %v993
        %1126 = vmatpush.msra.mxu0 %v992
        %1127 = vmatpush.msra.mxu0 %v991
        %1128 = vmatpush.msra.mxu0 %v990
        %1129 = vmatmul.f32.gmra.mxu0 %v1034
        %v1130 = vpop.f32.mrf.mxu0
        %v1131 = vadd.f32 %v1102, %v1130
        %1132 = vmatmul.f32.gmra.mxu0 %v1038
        %v1133 = vpop.f32.mrf.mxu0
        %v1134 = vadd.f32 %v1105, %v1133
        %1135 = vmatmul.f32.gmra.mxu0 %v1042
        %v1136 = vpop.f32.mrf.mxu0
        %v1137 = vadd.f32 %v1108, %v1136
        %1138 = vmatmul.f32.gmra.mxu0 %v1041
        %v1139 = vpop.f32.mrf.mxu0
        %v1140 = vadd.f32 %v1111, %v1139
        %1141 = vdwg.mxu0
        %v1142 = vmul.f32 %v1131, 0.1
        %v1143 = vmul.f32 %v1134, 0.1
        %v1144 = vmul.f32 %v1137, 0.1
        %v1145 = vmul.f32 %v1140, 0.1
        %v1146 = vmax.f32 %v1131, %v1142
        %v1147 = vmax.f32 %v1134, %v1143
        %v1148 = vmax.f32 %v1137, %v1144
        %v1149 = vmax.f32 %v1140, %v1145
        %vm1154 = vcmask 1042432
        %v1155 = vrot.slane %v1146, 5
        %v1156 = vrot.slane %v1147, 5
        %v1157 = vsel %vm1154, %v1155, %v1156
        %v1158 = vrot.slane %v1148, 5
        %v1159 = vsel %vm1154, %v1156, %v1158
        %v1160 = vrot.slane %v1149, 5
        %v1161 = vsel %vm1154, %v1158, %v1160
        %v1166 = vsel %vm524, %v1155, 0.0
        %v1167 = vsel %vm525, %v1157, 0.0
        %v1168 = vsel %vm526, %v1159, 0.0
        %v1169 = vsel %vm527, %v1161, 0.0
        %s1170 = scalar_lea.vmem [#allocation10], 384
        %v1171 = vld [vmem:[%s1170] sm:$0xff]
        %v1172 = vld [vmem:[%s1170 + $0x8] sm:$0xff]
        %v1173 = vld [vmem:[%s1170 + $0x10] sm:$0xff]
        %v1174 = vld [vmem:[%s1170 + $0x18] sm:$0xff]
        %v1175 = vld [vmem:[%s1170 + $0x20] sm:$0xff]
        %v1176 = vld [vmem:[%s1170 + $0x28] sm:$0xff]
        %v1177 = vld [vmem:[%s1170 + $0x30] sm:$0xff]
        %v1178 = vld [vmem:[%s1170 + $0x38] sm:$0xff]
        %v1179 = vld [vmem:[%s1170 + $0x40] sm:$0xff]
        %v1180 = vld [vmem:[%s1170 + $0x48] sm:$0xff]
        %v1181 = vld [vmem:[%s1170 + $0x50] sm:$0xff]
        %v1182 = vld [vmem:[%s1170 + $0x58] sm:$0xff]
        %v1183 = vld [vmem:[%s1170 + $0x60] sm:$0xff]
        %v1184 = vld [vmem:[%s1170 + $0x68] sm:$0xff]
        %v1185 = vld [vmem:[%s1170 + $0x70] sm:$0xff]
        %v1186 = vld [vmem:[%s1170 + $0x78] sm:$0xff]
        %v1187 = vld [vmem:[%s1170 + $0x80] sm:$0xff]
        %v1188 = vld [vmem:[%s1170 + $0x88] sm:$0xff]
        %v1189 = vld [vmem:[%s1170 + $0x90] sm:$0xff]
        %v1190 = vld [vmem:[%s1170 + $0x98] sm:$0xff]
        %v1191 = vld [vmem:[%s1170 + $0xa0] sm:$0xff]
        %v1192 = vld [vmem:[%s1170 + $0xa8] sm:$0xff]
        %v1193 = vld [vmem:[%s1170 + $0xb0] sm:$0xff]
        %v1194 = vld [vmem:[%s1170 + $0xb8] sm:$0xff]
        %v1195 = vld [vmem:[%s1170 + $0xc0] sm:$0xff]
        %v1196 = vld [vmem:[%s1170 + $0xc8] sm:$0xff]
        %v1197 = vld [vmem:[%s1170 + $0xd0] sm:$0xff]
        %v1198 = vld [vmem:[%s1170 + $0xd8] sm:$0xff]
        %v1199 = vld [vmem:[%s1170 + $0xe0] sm:$0xff]
        %v1200 = vld [vmem:[%s1170 + $0xe8] sm:$0xff]
        %v1201 = vld [vmem:[%s1170 + $0xf0] sm:$0xff]
        %v1202 = vld [vmem:[%s1170 + $0xf8] sm:$0xff]
        %v1203 = vld [vmem:[%s1170 + $0x100] sm:$0xff]
        %v1204 = vld [vmem:[%s1170 + $0x108] sm:$0xff]
        %v1205 = vld [vmem:[%s1170 + $0x110] sm:$0xff]
        %v1206 = vld [vmem:[%s1170 + $0x118] sm:$0xff]
        %v1207 = vld [vmem:[%s1170 + $0x120] sm:$0xff]
        %v1208 = vld [vmem:[%s1170 + $0x128] sm:$0xff]
        %v1209 = vld [vmem:[%s1170 + $0x130] sm:$0xff]
        %v1210 = vld [vmem:[%s1170 + $0x138] sm:$0xff]
        %v1211 = vld [vmem:[%s1170 + $0x140] sm:$0xff]
        %v1212 = vld [vmem:[%s1170 + $0x148] sm:$0xff]
        %v1213 = vld [vmem:[%s1170 + $0x150] sm:$0xff]
        %v1214 = vld [vmem:[%s1170 + $0x158] sm:$0xff]
        %v1215 = vld [vmem:[%s1170 + $0x160] sm:$0xff]
        %v1216 = vld [vmem:[%s1170 + $0x168] sm:$0xff]
        %v1217 = vld [vmem:[%s1170 + $0x170] sm:$0xff]
        %v1218 = vld [vmem:[%s1170 + $0x178] sm:$0xff]
        %s1219 = scalar_lea.vmem [#allocation11], 1
        %v1220 = vld [vmem:[%s1219] sm:$0x1]
        %v1225 = vrot.slane %v1166, 1
        %v1226 = vrot.slane %v1167, 1
        %v1227 = vsel %vm585, %v1225, %v1226
        %v1228 = vrot.slane %v1168, 1
        %v1229 = vsel %vm585, %v1226, %v1228
        %v1230 = vrot.slane %v1169, 1
        %v1231 = vsel %vm585, %v1228, %v1230
        %v1232 = vrot.slane %v1166, 2
        %v1233 = vrot.slane %v1167, 2
        %v1234 = vsel %vm597, %v1232, %v1233
        %v1235 = vrot.slane %v1168, 2
        %v1236 = vsel %vm597, %v1233, %v1235
        %v1237 = vrot.slane %v1169, 2
        %v1238 = vsel %vm597, %v1235, %v1237
        %v1240 = vperm.slane %v1220, 0
        %vm1242 = vcmask 1044480
        %v1243 = vrot.slane %v1166, 3
        %v1244 = vrot.slane %v1167, 3
        %v1245 = vsel %vm1242, %v1243, %v1244
        %v1246 = vrot.slane %v1227, 3
        %v1247 = vrot.slane %v1229, 3
        %v1248 = vsel %vm1242, %v1246, %v1247
        %v1249 = vrot.slane %v1234, 3
        %v1250 = vrot.slane %v1236, 3
        %v1251 = vsel %vm1242, %v1249, %v1250
        %v1252 = vrot.slane %v1168, 3
        %v1253 = vsel %vm1242, %v1244, %v1252
        %v1254 = vrot.slane %v1231, 3
        %v1255 = vsel %vm1242, %v1247, %v1254
        %v1256 = vrot.slane %v1238, 3
        %v1257 = vsel %vm1242, %v1250, %v1256
        %v1258 = vrot.slane %v1169, 3
        %v1259 = vsel %vm1242, %v1252, %v1258
        %v1260 = vrot.slane %v1230, 3
        %v1261 = vsel %vm1242, %v1254, %v1260
        %v1262 = vrot.slane %v1237, 3
        %v1263 = vsel %vm1242, %v1256, %v1262
        %1273 = vmatpush.msra.mxu0 %v1186
        %1274 = vmatpush.msra.mxu0 %v1185
        %1275 = vmatpush.msra.mxu0 %v1184
        %1276 = vmatpush.msra.mxu0 %v1183
        %1277 = vmatpush.msra.mxu0 %v1182
        %1278 = vmatpush.msra.mxu0 %v1181
        %1279 = vmatpush.msra.mxu0 %v1180
        %1280 = vmatpush.msra.mxu0 %v1179
        %1281 = vmatpush.msra.mxu0 %v1178
        %1282 = vmatpush.msra.mxu0 %v1177
        %1283 = vmatpush.msra.mxu0 %v1176
        %1284 = vmatpush.msra.mxu0 %v1175
        %1285 = vmatpush.msra.mxu0 %v1174
        %1286 = vmatpush.msra.mxu0 %v1173
        %1287 = vmatpush.msra.mxu0 %v1172
        %1288 = vmatpush.msra.mxu0 %v1171
        %1289 = vmatmul.f32.gmra.mxu0 %v1245
        %v1290 = vpop.f32.mrf.mxu0
        %v1291 = vadd.f32 %v1240, %v1290
        %1292 = vmatmul.f32.gmra.mxu0 %v1253
        %v1293 = vpop.f32.mrf.mxu0
        %v1294 = vadd.f32 %v1240, %v1293
        %1295 = vmatmul.f32.gmra.mxu0 %v1259
        %v1296 = vpop.f32.mrf.mxu0
        %v1297 = vadd.f32 %v1240, %v1296
        %1298 = vdwg.mxu0
        %1299 = vmatpush.msra.mxu0 %v1202
        %1300 = vmatpush.msra.mxu0 %v1201
        %1301 = vmatpush.msra.mxu0 %v1200
        %1302 = vmatpush.msra.mxu0 %v1199
        %1303 = vmatpush.msra.mxu0 %v1198
        %1304 = vmatpush.msra.mxu0 %v1197
        %1305 = vmatpush.msra.mxu0 %v1196
        %1306 = vmatpush.msra.mxu0 %v1195
        %1307 = vmatpush.msra.mxu0 %v1194
        %1308 = vmatpush.msra.mxu0 %v1193
        %1309 = vmatpush.msra.mxu0 %v1192
        %1310 = vmatpush.msra.mxu0 %v1191
        %1311 = vmatpush.msra.mxu0 %v1190
        %1312 = vmatpush.msra.mxu0 %v1189
        %1313 = vmatpush.msra.mxu0 %v1188
        %1314 = vmatpush.msra.mxu0 %v1187
        %1315 = vmatmul.f32.gmra.mxu0 %v1248
        %v1316 = vpop.f32.mrf.mxu0
        %v1317 = vadd.f32 %v1291, %v1316
        %1318 = vmatmul.f32.gmra.mxu0 %v1255
        %v1319 = vpop.f32.mrf.mxu0
        %v1320 = vadd.f32 %v1294, %v1319
        %1321 = vmatmul.f32.gmra.mxu0 %v1261
        %v1322 = vpop.f32.mrf.mxu0
        %v1323 = vadd.f32 %v1297, %v1322
        %1324 = vdwg.mxu0
        %1325 = vmatpush.msra.mxu0 %v1218
        %1326 = vmatpush.msra.mxu0 %v1217
        %1327 = vmatpush.msra.mxu0 %v1216
        %1328 = vmatpush.msra.mxu0 %v1215
        %1329 = vmatpush.msra.mxu0 %v1214
        %1330 = vmatpush.msra.mxu0 %v1213
        %1331 = vmatpush.msra.mxu0 %v1212
        %1332 = vmatpush.msra.mxu0 %v1211
        %1333 = vmatpush.msra.mxu0 %v1210
        %1334 = vmatpush.msra.mxu0 %v1209
        %1335 = vmatpush.msra.mxu0 %v1208
        %1336 = vmatpush.msra.mxu0 %v1207
        %1337 = vmatpush.msra.mxu0 %v1206
        %1338 = vmatpush.msra.mxu0 %v1205
        %1339 = vmatpush.msra.mxu0 %v1204
        %1340 = vmatpush.msra.mxu0 %v1203
        %1341 = vmatmul.f32.gmra.mxu0 %v1251
        %v1342 = vpop.f32.mrf.mxu0
        %v1343 = vadd.f32 %v1317, %v1342
        %1344 = vmatmul.f32.gmra.mxu0 %v1257
        %v1345 = vpop.f32.mrf.mxu0
        %v1346 = vadd.f32 %v1320, %v1345
        %1347 = vmatmul.f32.gmra.mxu0 %v1263
        %v1348 = vpop.f32.mrf.mxu0
        %v1349 = vadd.f32 %v1323, %v1348
        %1350 = vdwg.mxu0
        %v1355 = vrot.slane %v925, 2
        %v1356 = vrot.slane %v926, 2
        %v1357 = vsel %vm597, %v1355, %v1356
        %v1358 = vrot.slane %v927, 2
        %v1359 = vsel %vm597, %v1356, %v1358
        %v1360 = vrot.slane %v928, 2
        %v1361 = vsel %vm597, %v1358, %v1360
        %v1365 = vadd.f32 %v1343, %v1357
        %v1366 = vadd.f32 %v1346, %v1359
        %v1367 = vadd.f32 %v1349, %v1361
        %v1368 = vmul.f32 %v1365, 0.1
        %v1369 = vmul.f32 %v1366, 0.1
        %v1370 = vmul.f32 %v1367, 0.1
        %v1371 = vmax.f32 %v1365, %v1368
        %v1372 = vmax.f32 %v1366, %v1369
        %v1373 = vmax.f32 %v1367, %v1370
        %vm1377 = vcmask 1043456
        %v1378 = vrot.slane %v1371, 4
        %v1379 = vrot.slane %v1372, 4
        %v1380 = vsel %vm1377, %v1378, %v1379
        %v1381 = vrot.slane %v1373, 4
        %v1382 = vsel %vm1377, %v1379, %v1381
        %v1387 = vsel %vm524, %v1378, 0.0
        %v1388 = vsel %vm525, %v1380, 0.0
        %v1389 = vsel %vm526, %v1382, 0.0
        %v1390 = vsel %vm527, %v1381, 0.0
        %s1391 = scalar_lea.vmem [#allocation8], 768
        %v1392 = vld [vmem:[%s1391] sm:$0xff]
        %v1393 = vld [vmem:[%s1391 + $0x8] sm:$0xff]
        %v1394 = vld [vmem:[%s1391 + $0x10] sm:$0xff]
        %v1395 = vld [vmem:[%s1391 + $0x18] sm:$0xff]
        %v1396 = vld [vmem:[%s1391 + $0x20] sm:$0xff]
        %v1397 = vld [vmem:[%s1391 + $0x28] sm:$0xff]
        %v1398 = vld [vmem:[%s1391 + $0x30] sm:$0xff]
        %v1399 = vld [vmem:[%s1391 + $0x38] sm:$0xff]
        %v1400 = vld [vmem:[%s1391 + $0x40] sm:$0xff]
        %v1401 = vld [vmem:[%s1391 + $0x48] sm:$0xff]
        %v1402 = vld [vmem:[%s1391 + $0x50] sm:$0xff]
        %v1403 = vld [vmem:[%s1391 + $0x58] sm:$0xff]
        %v1404 = vld [vmem:[%s1391 + $0x60] sm:$0xff]
        %v1405 = vld [vmem:[%s1391 + $0x68] sm:$0xff]
        %v1406 = vld [vmem:[%s1391 + $0x70] sm:$0xff]
        %v1407 = vld [vmem:[%s1391 + $0x78] sm:$0xff]
        %v1408 = vld [vmem:[%s1391 + $0x80] sm:$0xff]
        %v1409 = vld [vmem:[%s1391 + $0x88] sm:$0xff]
        %v1410 = vld [vmem:[%s1391 + $0x90] sm:$0xff]
        %v1411 = vld [vmem:[%s1391 + $0x98] sm:$0xff]
        %v1412 = vld [vmem:[%s1391 + $0xa0] sm:$0xff]
        %v1413 = vld [vmem:[%s1391 + $0xa8] sm:$0xff]
        %v1414 = vld [vmem:[%s1391 + $0xb0] sm:$0xff]
        %v1415 = vld [vmem:[%s1391 + $0xb8] sm:$0xff]
        %v1416 = vld [vmem:[%s1391 + $0xc0] sm:$0xff]
        %v1417 = vld [vmem:[%s1391 + $0xc8] sm:$0xff]
        %v1418 = vld [vmem:[%s1391 + $0xd0] sm:$0xff]
        %v1419 = vld [vmem:[%s1391 + $0xd8] sm:$0xff]
        %v1420 = vld [vmem:[%s1391 + $0xe0] sm:$0xff]
        %v1421 = vld [vmem:[%s1391 + $0xe8] sm:$0xff]
        %v1422 = vld [vmem:[%s1391 + $0xf0] sm:$0xff]
        %v1423 = vld [vmem:[%s1391 + $0xf8] sm:$0xff]
        %v1424 = vld [vmem:[%s1391 + $0x100] sm:$0xff]
        %v1425 = vld [vmem:[%s1391 + $0x108] sm:$0xff]
        %v1426 = vld [vmem:[%s1391 + $0x110] sm:$0xff]
        %v1427 = vld [vmem:[%s1391 + $0x118] sm:$0xff]
        %v1428 = vld [vmem:[%s1391 + $0x120] sm:$0xff]
        %v1429 = vld [vmem:[%s1391 + $0x128] sm:$0xff]
        %v1430 = vld [vmem:[%s1391 + $0x130] sm:$0xff]
        %v1431 = vld [vmem:[%s1391 + $0x138] sm:$0xff]
        %v1432 = vld [vmem:[%s1391 + $0x140] sm:$0xff]
        %v1433 = vld [vmem:[%s1391 + $0x148] sm:$0xff]
        %v1434 = vld [vmem:[%s1391 + $0x150] sm:$0xff]
        %v1435 = vld [vmem:[%s1391 + $0x158] sm:$0xff]
        %v1436 = vld [vmem:[%s1391 + $0x160] sm:$0xff]
        %v1437 = vld [vmem:[%s1391 + $0x168] sm:$0xff]
        %v1438 = vld [vmem:[%s1391 + $0x170] sm:$0xff]
        %v1439 = vld [vmem:[%s1391 + $0x178] sm:$0xff]
        %s1440 = scalar_lea.vmem %s4, 2
        %v1441 = vld [vmem:[%s1440] sm:$0x1]
        %v1446 = vrot.slane %v1387, 1
        %v1447 = vrot.slane %v1388, 1
        %v1448 = vsel %vm585, %v1446, %v1447
        %v1449 = vrot.slane %v1389, 1
        %v1450 = vsel %vm585, %v1447, %v1449
        %v1451 = vrot.slane %v1390, 1
        %v1452 = vsel %vm585, %v1449, %v1451
        %v1453 = vrot.slane %v1387, 2
        %v1454 = vrot.slane %v1388, 2
        %v1455 = vsel %vm597, %v1453, %v1454
        %v1456 = vrot.slane %v1389, 2
        %v1457 = vsel %vm597, %v1454, %v1456
        %v1458 = vrot.slane %v1390, 2
        %v1459 = vsel %vm597, %v1456, %v1458
        %v1461 = vperm.slane %v1441, 0
        %v1463 = vrot.slane %v1387, 4
        %v1464 = vrot.slane %v1388, 4
        %v1465 = vsel %vm1377, %v1463, %v1464
        %v1466 = vrot.slane %v1448, 4
        %v1467 = vrot.slane %v1450, 4
        %v1468 = vsel %vm1377, %v1466, %v1467
        %v1469 = vrot.slane %v1455, 4
        %v1470 = vrot.slane %v1457, 4
        %v1471 = vsel %vm1377, %v1469, %v1470
        %v1472 = vrot.slane %v1389, 4
        %v1473 = vsel %vm1377, %v1464, %v1472
        %v1474 = vrot.slane %v1452, 4
        %v1475 = vsel %vm1377, %v1467, %v1474
        %v1476 = vrot.slane %v1459, 4
        %v1477 = vsel %vm1377, %v1470, %v1476
        %v1478 = vrot.slane %v1390, 4
        %v1479 = vsel %vm1377, %v1472, %v1478
        %v1480 = vrot.slane %v1451, 4
        %v1481 = vsel %vm1377, %v1474, %v1480
        %v1482 = vrot.slane %v1458, 4
        %v1483 = vsel %vm1377, %v1476, %v1482
        %1493 = vmatpush.msra.mxu0 %v1407
        %1494 = vmatpush.msra.mxu0 %v1406
        %1495 = vmatpush.msra.mxu0 %v1405
        %1496 = vmatpush.msra.mxu0 %v1404
        %1497 = vmatpush.msra.mxu0 %v1403
        %1498 = vmatpush.msra.mxu0 %v1402
        %1499 = vmatpush.msra.mxu0 %v1401
        %1500 = vmatpush.msra.mxu0 %v1400
        %1501 = vmatpush.msra.mxu0 %v1399
        %1502 = vmatpush.msra.mxu0 %v1398
        %1503 = vmatpush.msra.mxu0 %v1397
        %1504 = vmatpush.msra.mxu0 %v1396
        %1505 = vmatpush.msra.mxu0 %v1395
        %1506 = vmatpush.msra.mxu0 %v1394
        %1507 = vmatpush.msra.mxu0 %v1393
        %1508 = vmatpush.msra.mxu0 %v1392
        %1509 = vmatmul.f32.gmra.mxu0 %v1465
        %v1510 = vpop.f32.mrf.mxu0
        %v1511 = vadd.f32 %v1461, %v1510
        %1512 = vmatmul.f32.gmra.mxu0 %v1473
        %v1513 = vpop.f32.mrf.mxu0
        %v1514 = vadd.f32 %v1461, %v1513
        %1515 = vmatmul.f32.gmra.mxu0 %v1479
        %v1516 = vpop.f32.mrf.mxu0
        %v1517 = vadd.f32 %v1461, %v1516
        %1518 = vdwg.mxu0
        %1519 = vmatpush.msra.mxu0 %v1423
        %1520 = vmatpush.msra.mxu0 %v1422
        %1521 = vmatpush.msra.mxu0 %v1421
        %1522 = vmatpush.msra.mxu0 %v1420
        %1523 = vmatpush.msra.mxu0 %v1419
        %1524 = vmatpush.msra.mxu0 %v1418
        %1525 = vmatpush.msra.mxu0 %v1417
        %1526 = vmatpush.msra.mxu0 %v1416
        %1527 = vmatpush.msra.mxu0 %v1415
        %1528 = vmatpush.msra.mxu0 %v1414
        %1529 = vmatpush.msra.mxu0 %v1413
        %1530 = vmatpush.msra.mxu0 %v1412
        %1531 = vmatpush.msra.mxu0 %v1411
        %1532 = vmatpush.msra.mxu0 %v1410
        %1533 = vmatpush.msra.mxu0 %v1409
        %1534 = vmatpush.msra.mxu0 %v1408
        %1535 = vmatmul.f32.gmra.mxu0 %v1468
        %v1536 = vpop.f32.mrf.mxu0
        %v1537 = vadd.f32 %v1511, %v1536
        %1538 = vmatmul.f32.gmra.mxu0 %v1475
        %v1539 = vpop.f32.mrf.mxu0
        %v1540 = vadd.f32 %v1514, %v1539
        %1541 = vmatmul.f32.gmra.mxu0 %v1481
        %v1542 = vpop.f32.mrf.mxu0
        %v1543 = vadd.f32 %v1517, %v1542
        %1544 = vdwg.mxu0
        %1545 = vmatpush.msra.mxu0 %v1439
        %1546 = vmatpush.msra.mxu0 %v1438
        %1547 = vmatpush.msra.mxu0 %v1437
        %1548 = vmatpush.msra.mxu0 %v1436
        %1549 = vmatpush.msra.mxu0 %v1435
        %1550 = vmatpush.msra.mxu0 %v1434
        %1551 = vmatpush.msra.mxu0 %v1433
        %1552 = vmatpush.msra.mxu0 %v1432
        %1553 = vmatpush.msra.mxu0 %v1431
        %1554 = vmatpush.msra.mxu0 %v1430
        %1555 = vmatpush.msra.mxu0 %v1429
        %1556 = vmatpush.msra.mxu0 %v1428
        %1557 = vmatpush.msra.mxu0 %v1427
        %1558 = vmatpush.msra.mxu0 %v1426
        %1559 = vmatpush.msra.mxu0 %v1425
        %1560 = vmatpush.msra.mxu0 %v1424
        %1561 = vmatmul.f32.gmra.mxu0 %v1471
        %v1562 = vpop.f32.mrf.mxu0
        %v1563 = vadd.f32 %v1537, %v1562
        %1564 = vmatmul.f32.gmra.mxu0 %v1477
        %v1565 = vpop.f32.mrf.mxu0
        %v1566 = vadd.f32 %v1540, %v1565
        %1567 = vmatmul.f32.gmra.mxu0 %v1483
        %v1568 = vpop.f32.mrf.mxu0
        %v1569 = vadd.f32 %v1543, %v1568
        %1570 = vdwg.mxu0
        %v1571 = vmul.f32 %v1563, 0.1
        %v1572 = vmul.f32 %v1566, 0.1
        %v1573 = vmul.f32 %v1569, 0.1
        %v1574 = vmax.f32 %v1563, %v1571
        %v1575 = vmax.f32 %v1566, %v1572
        %v1576 = vmax.f32 %v1569, %v1573
        %v1580 = vrot.slane %v1574, 3
        %v1581 = vrot.slane %v1575, 3
        %v1582 = vsel %vm1242, %v1580, %v1581
        %v1583 = vrot.slane %v1576, 3
        %v1584 = vsel %vm1242, %v1581, %v1583
        %v1589 = vsel %vm524, %v1580, 0.0
        %v1590 = vsel %vm525, %v1582, 0.0
        %v1591 = vsel %vm526, %v1584, 0.0
        %v1592 = vsel %vm527, %v1583, 0.0
        %s1593 = scalar_lea.vmem [#allocation10], 768
        %v1594 = vld [vmem:[%s1593] sm:$0xff]
        %v1595 = vld [vmem:[%s1593 + $0x8] sm:$0xff]
        %v1596 = vld [vmem:[%s1593 + $0x10] sm:$0xff]
        %v1597 = vld [vmem:[%s1593 + $0x18] sm:$0xff]
        %v1598 = vld [vmem:[%s1593 + $0x20] sm:$0xff]
        %v1599 = vld [vmem:[%s1593 + $0x28] sm:$0xff]
        %v1600 = vld [vmem:[%s1593 + $0x30] sm:$0xff]
        %v1601 = vld [vmem:[%s1593 + $0x38] sm:$0xff]
        %v1602 = vld [vmem:[%s1593 + $0x40] sm:$0xff]
        %v1603 = vld [vmem:[%s1593 + $0x48] sm:$0xff]
        %v1604 = vld [vmem:[%s1593 + $0x50] sm:$0xff]
        %v1605 = vld [vmem:[%s1593 + $0x58] sm:$0xff]
        %v1606 = vld [vmem:[%s1593 + $0x60] sm:$0xff]
        %v1607 = vld [vmem:[%s1593 + $0x68] sm:$0xff]
        %v1608 = vld [vmem:[%s1593 + $0x70] sm:$0xff]
        %v1609 = vld [vmem:[%s1593 + $0x78] sm:$0xff]
        %v1610 = vld [vmem:[%s1593 + $0x80] sm:$0xff]
        %v1611 = vld [vmem:[%s1593 + $0x88] sm:$0xff]
        %v1612 = vld [vmem:[%s1593 + $0x90] sm:$0xff]
        %v1613 = vld [vmem:[%s1593 + $0x98] sm:$0xff]
        %v1614 = vld [vmem:[%s1593 + $0xa0] sm:$0xff]
        %v1615 = vld [vmem:[%s1593 + $0xa8] sm:$0xff]
        %v1616 = vld [vmem:[%s1593 + $0xb0] sm:$0xff]
        %v1617 = vld [vmem:[%s1593 + $0xb8] sm:$0xff]
        %v1618 = vld [vmem:[%s1593 + $0xc0] sm:$0xff]
        %v1619 = vld [vmem:[%s1593 + $0xc8] sm:$0xff]
        %v1620 = vld [vmem:[%s1593 + $0xd0] sm:$0xff]
        %v1621 = vld [vmem:[%s1593 + $0xd8] sm:$0xff]
        %v1622 = vld [vmem:[%s1593 + $0xe0] sm:$0xff]
        %v1623 = vld [vmem:[%s1593 + $0xe8] sm:$0xff]
        %v1624 = vld [vmem:[%s1593 + $0xf0] sm:$0xff]
        %v1625 = vld [vmem:[%s1593 + $0xf8] sm:$0xff]
        %v1626 = vld [vmem:[%s1593 + $0x100] sm:$0xff]
        %v1627 = vld [vmem:[%s1593 + $0x108] sm:$0xff]
        %v1628 = vld [vmem:[%s1593 + $0x110] sm:$0xff]
        %v1629 = vld [vmem:[%s1593 + $0x118] sm:$0xff]
        %v1630 = vld [vmem:[%s1593 + $0x120] sm:$0xff]
        %v1631 = vld [vmem:[%s1593 + $0x128] sm:$0xff]
        %v1632 = vld [vmem:[%s1593 + $0x130] sm:$0xff]
        %v1633 = vld [vmem:[%s1593 + $0x138] sm:$0xff]
        %v1634 = vld [vmem:[%s1593 + $0x140] sm:$0xff]
        %v1635 = vld [vmem:[%s1593 + $0x148] sm:$0xff]
        %v1636 = vld [vmem:[%s1593 + $0x150] sm:$0xff]
        %v1637 = vld [vmem:[%s1593 + $0x158] sm:$0xff]
        %v1638 = vld [vmem:[%s1593 + $0x160] sm:$0xff]
        %v1639 = vld [vmem:[%s1593 + $0x168] sm:$0xff]
        %v1640 = vld [vmem:[%s1593 + $0x170] sm:$0xff]
        %v1641 = vld [vmem:[%s1593 + $0x178] sm:$0xff]
        %s1642 = scalar_lea.vmem [#allocation11], 2
        %v1643 = vld [vmem:[%s1642] sm:$0x1]
        %v1648 = vrot.slane %v1589, 1
        %v1649 = vrot.slane %v1590, 1
        %v1650 = vsel %vm585, %v1648, %v1649
        %v1651 = vrot.slane %v1591, 1
        %v1652 = vsel %vm585, %v1649, %v1651
        %v1653 = vrot.slane %v1592, 1
        %v1654 = vsel %vm585, %v1651, %v1653
        %v1655 = vrot.slane %v1589, 2
        %v1656 = vrot.slane %v1590, 2
        %v1657 = vsel %vm597, %v1655, %v1656
        %v1658 = vrot.slane %v1591, 2
        %v1659 = vsel %vm597, %v1656, %v1658
        %v1660 = vrot.slane %v1592, 2
        %v1661 = vsel %vm597, %v1658, %v1660
        %v1663 = vperm.slane %v1643, 0
        %v1665 = vrot.slane %v1589, 5
        %v1666 = vrot.slane %v1590, 5
        %v1667 = vsel %vm1154, %v1665, %v1666
        %v1668 = vrot.slane %v1650, 5
        %v1669 = vrot.slane %v1652, 5
        %v1670 = vsel %vm1154, %v1668, %v1669
        %v1671 = vrot.slane %v1657, 5
        %v1672 = vrot.slane %v1659, 5
        %v1673 = vsel %vm1154, %v1671, %v1672
        %v1674 = vrot.slane %v1591, 5
        %v1675 = vsel %vm1154, %v1666, %v1674
        %v1676 = vrot.slane %v1654, 5
        %v1677 = vsel %vm1154, %v1669, %v1676
        %v1678 = vrot.slane %v1661, 5
        %v1679 = vsel %vm1154, %v1672, %v1678
        %v1680 = vrot.slane %v1592, 5
        %v1681 = vsel %vm1154, %v1674, %v1680
        %v1682 = vrot.slane %v1653, 5
        %v1683 = vsel %vm1154, %v1676, %v1682
        %v1684 = vrot.slane %v1660, 5
        %v1685 = vsel %vm1154, %v1678, %v1684
        %1695 = vmatpush.msra.mxu0 %v1609
        %1696 = vmatpush.msra.mxu0 %v1608
        %1697 = vmatpush.msra.mxu0 %v1607
        %1698 = vmatpush.msra.mxu0 %v1606
        %1699 = vmatpush.msra.mxu0 %v1605
        %1700 = vmatpush.msra.mxu0 %v1604
        %1701 = vmatpush.msra.mxu0 %v1603
        %1702 = vmatpush.msra.mxu0 %v1602
        %1703 = vmatpush.msra.mxu0 %v1601
        %1704 = vmatpush.msra.mxu0 %v1600
        %1705 = vmatpush.msra.mxu0 %v1599
        %1706 = vmatpush.msra.mxu0 %v1598
        %1707 = vmatpush.msra.mxu0 %v1597
        %1708 = vmatpush.msra.mxu0 %v1596
        %1709 = vmatpush.msra.mxu0 %v1595
        %1710 = vmatpush.msra.mxu0 %v1594
        %1711 = vmatmul.f32.gmra.mxu0 %v1667
        %v1712 = vpop.f32.mrf.mxu0
        %v1713 = vadd.f32 %v1663, %v1712
        %1714 = vmatmul.f32.gmra.mxu0 %v1675
        %v1715 = vpop.f32.mrf.mxu0
        %v1716 = vadd.f32 %v1663, %v1715
        %1717 = vmatmul.f32.gmra.mxu0 %v1681
        %v1718 = vpop.f32.mrf.mxu0
        %v1719 = vadd.f32 %v1663, %v1718
        %1720 = vdwg.mxu0
        %1721 = vmatpush.msra.mxu0 %v1625
        %1722 = vmatpush.msra.mxu0 %v1624
        %1723 = vmatpush.msra.mxu0 %v1623
        %1724 = vmatpush.msra.mxu0 %v1622
        %1725 = vmatpush.msra.mxu0 %v1621
        %1726 = vmatpush.msra.mxu0 %v1620
        %1727 = vmatpush.msra.mxu0 %v1619
        %1728 = vmatpush.msra.mxu0 %v1618
        %1729 = vmatpush.msra.mxu0 %v1617
        %1730 = vmatpush.msra.mxu0 %v1616
        %1731 = vmatpush.msra.mxu0 %v1615
        %1732 = vmatpush.msra.mxu0 %v1614
        %1733 = vmatpush.msra.mxu0 %v1613
        %1734 = vmatpush.msra.mxu0 %v1612
        %1735 = vmatpush.msra.mxu0 %v1611
        %1736 = vmatpush.msra.mxu0 %v1610
        %1737 = vmatmul.f32.gmra.mxu0 %v1670
        %v1738 = vpop.f32.mrf.mxu0
        %v1739 = vadd.f32 %v1713, %v1738
        %1740 = vmatmul.f32.gmra.mxu0 %v1677
        %v1741 = vpop.f32.mrf.mxu0
        %v1742 = vadd.f32 %v1716, %v1741
        %1743 = vmatmul.f32.gmra.mxu0 %v1683
        %v1744 = vpop.f32.mrf.mxu0
        %v1745 = vadd.f32 %v1719, %v1744
        %1746 = vdwg.mxu0
        %1747 = vmatpush.msra.mxu0 %v1641
        %1748 = vmatpush.msra.mxu0 %v1640
        %1749 = vmatpush.msra.mxu0 %v1639
        %1750 = vmatpush.msra.mxu0 %v1638
        %1751 = vmatpush.msra.mxu0 %v1637
        %1752 = vmatpush.msra.mxu0 %v1636
        %1753 = vmatpush.msra.mxu0 %v1635
        %1754 = vmatpush.msra.mxu0 %v1634
        %1755 = vmatpush.msra.mxu0 %v1633
        %1756 = vmatpush.msra.mxu0 %v1632
        %1757 = vmatpush.msra.mxu0 %v1631
        %1758 = vmatpush.msra.mxu0 %v1630
        %1759 = vmatpush.msra.mxu0 %v1629
        %1760 = vmatpush.msra.mxu0 %v1628
        %1761 = vmatpush.msra.mxu0 %v1627
        %1762 = vmatpush.msra.mxu0 %v1626
        %1763 = vmatmul.f32.gmra.mxu0 %v1673
        %v1764 = vpop.f32.mrf.mxu0
        %v1765 = vadd.f32 %v1739, %v1764
        %1766 = vmatmul.f32.gmra.mxu0 %v1679
        %v1767 = vpop.f32.mrf.mxu0
        %v1768 = vadd.f32 %v1742, %v1767
        %1769 = vmatmul.f32.gmra.mxu0 %v1685
        %v1770 = vpop.f32.mrf.mxu0
        %v1771 = vadd.f32 %v1745, %v1770
        %1772 = vdwg.mxu0
        %v1776 = vrot.slane %v1365, 2
        %v1777 = vrot.slane %v1366, 2
        %v1778 = vsel %vm597, %v1776, %v1777
        %v1779 = vrot.slane %v1367, 2
        %v1780 = vsel %vm597, %v1777, %v1779
        %v1784 = vadd.f32 %v1765, %v1778
        %v1785 = vadd.f32 %v1768, %v1780
        %v1786 = vadd.f32 %v1771, %v1779
        %1787 = vst [vmem:[%s473 - $0x2] sm:$0xfc] %v1784
        %1788 = vst [vmem:[%s473 + $0x6] sm:$0xff] %v1785
        %1789 = vst [vmem:[%s473 + $0xe] sm:$0x3] %v1786
        %s1790 = sand.u32 %s235, 1
        %s1791 = scalar_lea.sflag [#allocation4], %s1790
        %s1792 = sand.u32 %s235, 1
        %s1793 = smul.addr %s1792, 16
        %s1794 = scalar_lea.vmem [#allocation13], %s1793
        // Predicated region
        $region73: #{tpu_custom_call.1} parent=47 // pred_check
          %p1795 = pneg %p245
        $region74: #{tpu_custom_call.1} parent=47 // pred_check_branch
          %1797 = sbr.rel (%p1795) target = $region76
        $region75: #{tpu_custom_call.1} parent=47 // pred_region
          %s1798 = smul.u32 2, %s34
          %1800 = vsyncadd %s1791, 0
          %s1801 = smul.addr %s33, 2
          %s1802 = sadd.s32 %s1798, %s1801
          %s1803 = smul.addr %s1802, 8
          %s1804 = scalar_lea.hbm %s7, %s1803
          %s1805 = sshll.u32 %s1794, 4
          %s1806 = int_to_ptr.vmem [resolvable:$true] %s1805
          %s1807 = sshll.u32 %s1804, 4
          %s1808 = int_to_ptr.hbm [resolvable:$true] %s1807
          %1813 = dma.vmem_to_hbm [thread:$0]  %s1806, 256, %s1808, %s1791, 128, 128, 8
        $region76: #{tpu_custom_call.1} parent=47 // pred_fallthru
          _
      $region48: #{tpu_custom_call.1} parent=5 // pred_fallthru
        _
      %p1814 = scmp.le.s32.totalorder 2, %s24
      // Predicated region
      $region77: #{tpu_custom_call.1} parent=5 // pred_check
        %p1815 = pneg %p1814
      $region78: #{tpu_custom_call.1} parent=5 // pred_check_branch
        %1817 = sbr.rel (%p1815) target = $region80
      $region79: #{tpu_custom_call.1} parent=5 // pred_region
        %s1818 = ssub.s32 %s24, 2
        // Predicated region
        $region81: #{tpu_custom_call.1} parent=79 // pred_check
          %p1819 = pneg %p251
        $region82: #{tpu_custom_call.1} parent=79 // pred_check_branch
          %1821 = sbr.rel (%p1819) target = $region84
        $region83: #{tpu_custom_call.1} parent=79 // pred_region
          %s1822 = sand.u32 %s236, 1
          %s1823 = scalar_lea.sflag [#allocation4], %s1822
          %s1824 = sand.u32 %s236, 1
          %s1825 = smul.addr %s1824, 16
          %s1826 = scalar_lea.vmem [#allocation13], %s1825
          %1828 = dma.done %s1823, 256
        $region84: #{tpu_custom_call.1} parent=79 // pred_fallthru
          _
      $region80: #{tpu_custom_call.1} parent=5 // pred_fallthru
        _
    $region6: #{tpu_custom_call.1} parent=1 // loop_footer
      %s28 = sadd.s32 1, %s24
    $region7: #{tpu_custom_call.1} parent=1 // loop_footer_branch
      %23 = sbr.rel target = $region3
    $region8: #{tpu_custom_call.1} parent=1 // loop_exit
      _
    %1829 = vsyncpa [#allocation3], 1
    %s1830 = scalar_lea.sflag [#allocation3], 1
    %1831 = vsyncpa %s1830, 1
    %1832 = vsyncpa [#allocation6], 1
    %s1833 = scalar_lea.sflag [#allocation6], 1
    %1834 = vsyncpa %s1833, 1
    %1835 = vsyncpa [#allocation9], 1
    %1836 = vsyncpa [#allocation12], 1
    %1837 = vsyncpa [#allocation4], 1
    %s1838 = scalar_lea.sflag [#allocation4], 1
    %1839 = vsyncpa %s1838, 1

</llo_original>
